<compile_context>
chip_gen: v7x
topology: tpu7x:2x2x1
jax: 0.10.0
libtpu: 0.0.40
codegen_flags: <defaults>
</compile_context>

<pallas_src>
import jax
import jax.numpy as jnp
from jax.experimental import pallas as pl
from jax.experimental.pallas import tpu as pltpu


# ----------------------------- model config (small, synthetic) -------------
BATCH = 2
SEQ = 8
HIDDEN = 32
NUM_HEADS = 2
HEAD_DIM = HIDDEN // NUM_HEADS
INTERMEDIATE = 64
NUM_LAYERS = 2
VOCAB = 100
MAX_POS = 16
TYPE_VOCAB = 2
LN_EPS = 1e-12
DROPOUT_P = 0.0  # config_bert.dropout -> 0.0 => nn.Dropout is identity


# ----------------------------- in-kernel helpers -----------------------------
def _layernorm(x, g, b):
    """f32 LayerNorm over the last axis; g/b broadcast as (1, H)."""
    mu = jnp.mean(x, axis=-1, keepdims=True)
    var = jnp.mean((x - mu) ** 2, axis=-1, keepdims=True)
    return (x - mu) * jax.lax.rsqrt(var + LN_EPS) * g + b


# ----------------------------- fused encoder kernel --------------------------
def _encoder_kernel(emb_ref, mask_ref, eg_ref, eb_ref,
                    qkvw_ref, qkvb_ref, ow_ref, obias_ref,
                    ag_ref, ab_ref,
                    w1_ref, b1_ref, w2_ref, b2_ref,
                    og_ref, ogb_ref,
                    out_ref,
                    x_vmem, qkv_vmem, ctx_vmem):
    """One grid step == one full transformer encoder layer.

    x (B*S, HIDDEN) stays resident in x_vmem across the layer grid axis.
    """
    layer = pl.program_id(0)

    # Layer 0: fused embedding LayerNorm seeds the resident hidden state.
    @pl.when(layer == 0)
    def _():
        x_vmem[...] = _layernorm(emb_ref[...], eg_ref[...], eb_ref[...])

    x = x_vmem[...]                                           # (M, H) f32

    # ---- fused QKV projection (bf16 MXU, f32 accumulate) ----
    qkv_vmem[...] = (
        jnp.dot(x.astype(jnp.bfloat16), qkvw_ref[0],
                preferred_element_type=jnp.float32) + qkvb_ref[0])

    # ---- multi-head self-attention, all (batch, head) pairs in this body ----
    mask = mask_ref[...]                                      # (B, S) additive
    scale = 1.0 / (HEAD_DIM ** 0.5)
    for b in range(BATCH):
        r0, r1 = b * SEQ, (b + 1) * SEQ
        m_b = mask[b:b + 1, :]                                # (1, S)
        for h in range(NUM_HEADS):
            c0 = h * HEAD_DIM
            q = qkv_vmem[r0:r1, c0:c0 + HEAD_DIM]             # (S, D)
            k = qkv_vmem[r0:r1, HIDDEN + c0:HIDDEN + c0 + HEAD_DIM]
            v = qkv_vmem[r0:r1, 2 * HIDDEN + c0:2 * HIDDEN + c0 + HEAD_DIM]
            # contract on last dims (no materialized transpose of k)
            s = jax.lax.dot_general(
                q.astype(jnp.bfloat16), k.astype(jnp.bfloat16),
                (((1,), (1,)), ((), ())),
                preferred_element_type=jnp.float32) * scale + m_b
            s = s - jnp.max(s, axis=-1, keepdims=True)
            p = jnp.exp(s)
            p = p * pl.reciprocal(jnp.sum(p, axis=-1, keepdims=True),
                                  approx=True)
            ctx_vmem[r0:r1, c0:c0 + HEAD_DIM] = jnp.dot(
                p.astype(jnp.bfloat16), v.astype(jnp.bfloat16),
                preferred_element_type=jnp.float32)

    # ---- output projection + residual + LayerNorm (fused) ----
    attn = (jnp.dot(ctx_vmem[...].astype(jnp.bfloat16), ow_ref[0],
                    preferred_element_type=jnp.float32) + obias_ref[0])
    x = _layernorm(x + attn, ag_ref[0], ab_ref[0])

    # ---- FFN + residual + LayerNorm (fused) ----
    h1 = (jnp.dot(x.astype(jnp.bfloat16), w1_ref[0],
                  preferred_element_type=jnp.float32) + b1_ref[0])
    # TODO(synk): HF BERT's 'gelu' is the exact erf form; tanh-approx kept here
    # for guaranteed Mosaic lowering (small numeric difference).
    h1 = jax.nn.gelu(h1, approximate=True)
    ffn = (jnp.dot(h1.astype(jnp.bfloat16), w2_ref[0],
                   preferred_element_type=jnp.float32) + b2_ref[0])
    x = _layernorm(x + ffn, og_ref[0], ogb_ref[0])

    x_vmem[...] = x

    @pl.when(layer == pl.num_programs(0) - 1)
    def _():
        out_ref[...] = x


def encoder_stack(p, emb, add_mask):
    """Run all NUM_LAYERS encoder layers in a single pallas_call."""
    M = emb.shape[0]
    H, I3, I = HIDDEN, 3 * HIDDEN, INTERMEDIATE

    def fixed(shape):
        return pl.BlockSpec(shape, lambda l, _s=shape: (0,) * len(_s))

    def per_layer(shape):
        return pl.BlockSpec((1,) + shape,
                            lambda l, _s=shape: (l,) + (0,) * len(_s))

    return pl.pallas_call(
        _encoder_kernel,
        out_shape=jax.ShapeDtypeStruct((M, H), jnp.float32),
        grid=(NUM_LAYERS,),
        in_specs=[
            fixed((M, H)),            # emb (pre-LayerNorm embedding sum)
            fixed((BATCH, SEQ)),      # additive attention mask
            fixed((1, H)),            # emb_ln_g
            fixed((1, H)),            # emb_ln_b
            per_layer((H, I3)),       # qkv_w  (stacked, bf16)
            per_layer((1, I3)),       # qkv_b
            per_layer((H, H)),        # o_w    (stacked, bf16)
            per_layer((1, H)),        # o_b
            per_layer((1, H)),        # attn_ln_g
            per_layer((1, H)),        # attn_ln_b
            per_layer((H, I)),        # ffn_w1 (stacked, bf16)
            per_layer((1, I)),        # ffn_b1
            per_layer((I, H)),        # ffn_w2 (stacked, bf16)
            per_layer((1, H)),        # ffn_b2
            per_layer((1, H)),        # out_ln_g
            per_layer((1, H)),        # out_ln_b
        ],
        out_specs=pl.BlockSpec((M, H), lambda l: (0, 0)),
        scratch_shapes=[
            pltpu.VMEM((M, H), jnp.float32),    # resident hidden state x
            pltpu.VMEM((M, I3), jnp.float32),   # fused QKV activations
            pltpu.VMEM((M, H), jnp.float32),    # attention context
        ],
        compiler_params=pltpu.CompilerParams(
            dimension_semantics=("arbitrary",)),   # layer axis is sequential
    )(emb, add_mask, p["emb_ln_g"], p["emb_ln_b"],
      p["qkv_w"], p["qkv_b"], p["o_w"], p["o_b"],
      p["attn_ln_g"], p["attn_ln_b"],
      p["ffn_w1"], p["ffn_b1"], p["ffn_w2"], p["ffn_b2"],
      p["out_ln_g"], p["out_ln_b"])


# ----------------------------- fused pooler + classifier ---------------------
def _pooler_cls_kernel(cls_ref, pw_ref, pb_ref, cw_ref, cb_ref,
                       pooled_ref, logits_ref):
    pooled = jnp.tanh(
        jnp.dot(cls_ref[...], pw_ref[...],
                preferred_element_type=jnp.float32) + pb_ref[...])
    pooled_ref[...] = pooled
    # Dropout(p=0.0) is identity, so the classifier consumes pooled directly.
    logits_ref[...] = (jnp.dot(pooled, cw_ref[...],
                               preferred_element_type=jnp.float32)
                       + cb_ref[...])


def pooler_classifier(cls_tok, p):
    B, H = cls_tok.shape
    return pl.pallas_call(
        _pooler_cls_kernel,
        out_shape=(jax.ShapeDtypeStruct((B, H), jnp.float32),
                   jax.ShapeDtypeStruct((B, 1), jnp.float32)),
        grid=(1,),
        in_specs=[
            pl.BlockSpec((B, H), lambda i: (0, 0)),
            pl.BlockSpec((H, H), lambda i: (0, 0)),
            pl.BlockSpec((1, H), lambda i: (0, 0)),
            pl.BlockSpec((H, 1), lambda i: (0, 0)),
            pl.BlockSpec((1, 1), lambda i: (0, 0)),
        ],
        out_specs=(pl.BlockSpec((B, H), lambda i: (0, 0)),
                   pl.BlockSpec((B, 1), lambda i: (0, 0))),
    )(cls_tok, p["pool_w"], p["pool_b"], p["cls_w"], p["cls_b"])


# ----------------------------- parameter init -------------------------------
def init_params(key):
    def nrm(k, shape, dtype=jnp.float32, scale=0.02):
        return (scale * jax.random.normal(k, shape)).astype(dtype)

    keys = iter(jax.random.split(key, 12))
    L, H, I = NUM_LAYERS, HIDDEN, INTERMEDIATE
    return {
        "word_emb": nrm(next(keys), (VOCAB, H)),
        "pos_emb": nrm(next(keys), (MAX_POS, H)),
        "type_emb": nrm(next(keys), (TYPE_VOCAB, H)),
        "emb_ln_g": jnp.ones((1, H), jnp.float32),
        "emb_ln_b": jnp.zeros((1, H), jnp.float32),
        # per-layer weights stacked on a leading layer axis; matmul weights bf16
        "qkv_w": nrm(next(keys), (L, H, 3 * H), jnp.bfloat16),
        "qkv_b": jnp.zeros((L, 1, 3 * H), jnp.float32),
        "o_w": nrm(next(keys), (L, H, H), jnp.bfloat16),
        "o_b": jnp.zeros((L, 1, H), jnp.float32),
        "attn_ln_g": jnp.ones((L, 1, H), jnp.float32),
        "attn_ln_b": jnp.zeros((L, 1, H), jnp.float32),
        "ffn_w1": nrm(next(keys), (L, H, I), jnp.bfloat16),
        "ffn_b1": jnp.zeros((L, 1, I), jnp.float32),
        "ffn_w2": nrm(next(keys), (L, I, H), jnp.bfloat16),
        "ffn_b2": jnp.zeros((L, 1, H), jnp.float32),
        "out_ln_g": jnp.ones((L, 1, H), jnp.float32),
        "out_ln_b": jnp.zeros((L, 1, H), jnp.float32),
        "pool_w": nrm(next(keys), (H, H)),
        "pool_b": jnp.zeros((1, H), jnp.float32),
        "cls_w": nrm(next(keys), (H, 1)),
        "cls_b": jnp.zeros((1, 1), jnp.float32),
    }


# ----------------------------- forward pass ----------------------------------
def bert_for_2_classification(params, input_ids, attention_mask, token_type_ids,
                              train=True):
    # .view(-1, size(-1)) flattening of leading dims
    input_ids = input_ids.reshape(-1, input_ids.shape[-1])
    attention_mask = attention_mask.reshape(-1, attention_mask.shape[-1])
    token_type_ids = token_type_ids.reshape(-1, token_type_ids.shape[-1])
    B, S = input_ids.shape

    # ---- embeddings (gathers = plain-JAX glue); LayerNorm fused into layer 0
    pos_ids = jnp.arange(S, dtype=jnp.int32)
    emb = (params["word_emb"][input_ids]
           + params["pos_emb"][pos_ids][None, :, :]
           + params["type_emb"][token_type_ids])
    emb = emb.reshape(B * S, HIDDEN)

    # additive attention mask (B, S): 0 for keep, -10000 for masked
    add_mask = (1.0 - attention_mask.astype(jnp.float32)) * -10000.0

    # ---- full encoder stack: ONE pallas_call, x resident in VMEM
    x = encoder_stack(params, emb, add_mask)                  # (B*S, HIDDEN)

    # ---- pooler + classifier: ONE fused pallas_call
    cls_tok = x.reshape(B, S, HIDDEN)[:, 0, :]                # (B, HIDDEN)
    pooled, logits = pooler_classifier(cls_tok, params)

    d_pooled = pooled  # Dropout(p=0.0) -> identity, deterministic
    if train:
        return logits, d_pooled
    # TODO(synk): eval path reshapes logits to (-1, 5) in the reference; with a
    # 1-wide classifier this is only valid for specific batch sizes.
    return logits.reshape(-1, 5)


# ----------------------------- main ------------------------------------------
if __name__ == "__main__":
    key = jax.random.PRNGKey(0)
    pkey, ikey, tkey = jax.random.split(key, 3)

    params = init_params(pkey)

    input_ids = jax.random.randint(ikey, (BATCH, SEQ), 0, VOCAB, dtype=jnp.int32)
    attention_mask = jnp.ones((BATCH, SEQ), dtype=jnp.int32)
    token_type_ids = jax.random.randint(tkey, (BATCH, SEQ), 0, TYPE_VOCAB,
                                        dtype=jnp.int32)

    logits, d_pooled = bert_for_2_classification(
        params, input_ids, attention_mask, token_type_ids, train=True)
    jax.block_until_ready((logits, d_pooled))

    assert logits.shape == (BATCH, 1)
    assert d_pooled.shape == (BATCH, HIDDEN)
    print("KERNEL_OK")
</pallas_src>

<mosaic_0001>
module attributes {stable_mosaic.version = 11 : i64} {
  func.func @_encoder_kernel(%arg0: i32, %arg1: memref<16x32xf32, #tpu.memory_space<vmem>>, %arg2: memref<2x8xf32, #tpu.memory_space<vmem>>, %arg3: memref<1x32xf32, #tpu.memory_space<vmem>>, %arg4: memref<1x32xf32, #tpu.memory_space<vmem>>, %arg5: memref<1x32x96xbf16, #tpu.memory_space<vmem>>, %arg6: memref<1x1x96xf32, #tpu.memory_space<vmem>>, %arg7: memref<1x32x32xbf16, #tpu.memory_space<vmem>>, %arg8: memref<1x1x32xf32, #tpu.memory_space<vmem>>, %arg9: memref<1x1x32xf32, #tpu.memory_space<vmem>>, %arg10: memref<1x1x32xf32, #tpu.memory_space<vmem>>, %arg11: memref<1x32x64xbf16, #tpu.memory_space<vmem>>, %arg12: memref<1x1x64xf32, #tpu.memory_space<vmem>>, %arg13: memref<1x64x32xbf16, #tpu.memory_space<vmem>>, %arg14: memref<1x1x32xf32, #tpu.memory_space<vmem>>, %arg15: memref<1x1x32xf32, #tpu.memory_space<vmem>>, %arg16: memref<1x1x32xf32, #tpu.memory_space<vmem>>, %arg17: memref<16x32xf32, #tpu.memory_space<vmem>>, %arg18: memref<16x32xf32, #tpu.memory_space<vmem>>, %arg19: memref<16x96xf32, #tpu.memory_space<vmem>>, %arg20: memref<16x32xf32, #tpu.memory_space<vmem>>) attributes {dimension_semantics = [#tpu.dimension_semantics<arbitrary>], iteration_bounds = array<i64: 2>, scalar_prefetch = 0 : i64, scratch_operands = 3 : i64, tpu.core_type = #tpu.core_type<tc>, window_params = [{pipeline_mode = #tpu.pipeline_mode<synchronous>, transform_indices = @transform_0, window_bounds = array<i64: 16, 32>}, {pipeline_mode = #tpu.pipeline_mode<synchronous>, transform_indices = @transform_1, window_bounds = array<i64: 2, 8>}, {pipeline_mode = #tpu.pipeline_mode<synchronous>, transform_indices = @transform_2, window_bounds = array<i64: 1, 32>}, {pipeline_mode = #tpu.pipeline_mode<synchronous>, transform_indices = @transform_3, window_bounds = array<i64: 1, 32>}, {transform_indices = @transform_4, window_bounds = array<i64: 1, 32, 96>}, {transform_indices = @transform_5, window_bounds = array<i64: 1, 1, 96>}, {transform_indices = @transform_6, window_bounds = array<i64: 1, 32, 32>}, {transform_indices = @transform_7, window_bounds = array<i64: 1, 1, 32>}, {transform_indices = @transform_8, window_bounds = array<i64: 1, 1, 32>}, {transform_indices = @transform_9, window_bounds = array<i64: 1, 1, 32>}, {transform_indices = @transform_10, window_bounds = array<i64: 1, 32, 64>}, {transform_indices = @transform_11, window_bounds = array<i64: 1, 1, 64>}, {transform_indices = @transform_12, window_bounds = array<i64: 1, 64, 32>}, {transform_indices = @transform_13, window_bounds = array<i64: 1, 1, 32>}, {transform_indices = @transform_14, window_bounds = array<i64: 1, 1, 32>}, {transform_indices = @transform_15, window_bounds = array<i64: 1, 1, 32>}, {pipeline_mode = #tpu.pipeline_mode<synchronous>, transform_indices = @transform_16, window_bounds = array<i64: 16, 32>}]} {
    %c0_i32 = arith.constant 0 : i32
    %0 = arith.cmpi eq, %arg0, %c0_i32 : i32
    %1 = arith.extui %0 : i1 to i32
    %c0_i32_0 = arith.constant 0 : i32
    %2 = arith.cmpi ne, %1, %c0_i32_0 : i32
    scf.if %2 {
      %c0_110 = arith.constant 0 : index
      %c0_111 = arith.constant 0 : index
      %208 = vector.load %arg1[%c0_110, %c0_111] : memref<16x32xf32, #tpu.memory_space<vmem>>, vector<16x32xf32>
      %c0_112 = arith.constant 0 : index
      %c0_113 = arith.constant 0 : index
      %209 = vector.load %arg3[%c0_112, %c0_113] : memref<1x32xf32, #tpu.memory_space<vmem>>, vector<1x32xf32>
      %c0_114 = arith.constant 0 : index
      %c0_115 = arith.constant 0 : index
      %210 = vector.load %arg4[%c0_114, %c0_115] : memref<1x32xf32, #tpu.memory_space<vmem>>, vector<1x32xf32>
      %cst_116 = arith.constant dense<0.000000e+00> : vector<16xf32>
      %211 = vector.multi_reduction <add>, %208, %cst_116 [1] : vector<16x32xf32> to vector<16xf32>
      %212 = vector.shape_cast %211 : vector<16xf32> to vector<16x1xf32>
      %cst_117 = arith.constant 3.200000e+01 : f32
      %213 = vector.broadcast %cst_117 : f32 to vector<16x1xf32>
      %214 = arith.divf %212, %213 : vector<16x1xf32>
      %215 = vector.broadcast %214 : vector<16x1xf32> to vector<16x32xf32>
      %216 = arith.subf %208, %215 : vector<16x32xf32>
      %217 = arith.mulf %216, %216 : vector<16x32xf32>
      %cst_118 = arith.constant dense<0.000000e+00> : vector<16xf32>
      %218 = vector.multi_reduction <add>, %217, %cst_118 [1] : vector<16x32xf32> to vector<16xf32>
      %219 = vector.shape_cast %218 : vector<16xf32> to vector<16x1xf32>
      %cst_119 = arith.constant 3.200000e+01 : f32
      %220 = vector.broadcast %cst_119 : f32 to vector<16x1xf32>
      %221 = arith.divf %219, %220 : vector<16x1xf32>
      %222 = vector.broadcast %214 : vector<16x1xf32> to vector<16x32xf32>
      %223 = arith.subf %208, %222 : vector<16x32xf32>
      %cst_120 = arith.constant 9.99999996E-13 : f32
      %224 = vector.broadcast %cst_120 : f32 to vector<16x1xf32>
      %225 = arith.addf %221, %224 : vector<16x1xf32>
      %226 = math.rsqrt %225 : vector<16x1xf32>
      %227 = vector.broadcast %226 : vector<16x1xf32> to vector<16x32xf32>
      %228 = arith.mulf %223, %227 : vector<16x32xf32>
      %229 = vector.broadcast %209 : vector<1x32xf32> to vector<16x32xf32>
      %230 = arith.mulf %228, %229 : vector<16x32xf32>
      %231 = vector.broadcast %210 : vector<1x32xf32> to vector<16x32xf32>
      %232 = arith.addf %230, %231 : vector<16x32xf32>
      %c0_121 = arith.constant 0 : index
      %c0_122 = arith.constant 0 : index
      %233 = vector.load %arg18[%c0_121, %c0_122] : memref<16x32xf32, #tpu.memory_space<vmem>>, vector<16x32xf32>
      tpu.vector_store %arg18[%c0_121, %c0_122], %232 {strides = array<i32>} : memref<16x32xf32, #tpu.memory_space<vmem>>, vector<16x32xf32>,
    } else {
    }
    %c0 = arith.constant 0 : index
    %c0_1 = arith.constant 0 : index
    %3 = vector.load %arg18[%c0, %c0_1] : memref<16x32xf32, #tpu.memory_space<vmem>>, vector<16x32xf32>
    %4 = arith.truncf %3 : vector<16x32xf32> to vector<16x32xbf16>
    %c0_2 = arith.constant 0 : index
    %c0_3 = arith.constant 0 : index
    %c0_4 = arith.constant 0 : index
    %5 = vector.load %arg5[%c0_2, %c0_3, %c0_4] : memref<1x32x96xbf16, #tpu.memory_space<vmem>>, vector<1x32x96xbf16>
    %6 = vector.shape_cast %5 : vector<1x32x96xbf16> to vector<32x96xbf16>
    %cst = arith.constant dense<0.000000e+00> : vector<16x96xf32>
    %7 = tpu.matmul %4, %6, %cst {dimension_numbers = #tpu.dot_dimension_numbers<[1], [0], [0], [1], [0, 0, 1, 1], [], []>} : vector<16x32xbf16>, vector<32x96xbf16>, vector<16x96xf32> -> vector<16x96xf32>
    %c0_5 = arith.constant 0 : index
    %c0_6 = arith.constant 0 : index
    %c0_7 = arith.constant 0 : index
    %8 = vector.load %arg6[%c0_5, %c0_6, %c0_7] : memref<1x1x96xf32, #tpu.memory_space<vmem>>, vector<1x1x96xf32>
    %9 = vector.shape_cast %8 : vector<1x1x96xf32> to vector<1x96xf32>
    %10 = vector.broadcast %9 : vector<1x96xf32> to vector<16x96xf32>
    %11 = arith.addf %7, %10 : vector<16x96xf32>
    %c0_8 = arith.constant 0 : index
    %c0_9 = arith.constant 0 : index
    %12 = vector.load %arg19[%c0_8, %c0_9] : memref<16x96xf32, #tpu.memory_space<vmem>>, vector<16x96xf32>
    tpu.vector_store %arg19[%c0_8, %c0_9], %11 {strides = array<i32>} : memref<16x96xf32, #tpu.memory_space<vmem>>, vector<16x96xf32>,
    %c0_10 = arith.constant 0 : index
    %c0_11 = arith.constant 0 : index
    %13 = vector.load %arg2[%c0_10, %c0_11] : memref<2x8xf32, #tpu.memory_space<vmem>>, vector<2x8xf32>
    %14 = vector.extract_strided_slice %13 {offsets = [0, 0], sizes = [1, 8], strides = [1, 1]} : vector<2x8xf32> to vector<1x8xf32>
    %c0_12 = arith.constant 0 : index
    %c0_13 = arith.constant 0 : index
    %15 = vector.load %arg19[%c0_12, %c0_13] : memref<16x96xf32, #tpu.memory_space<vmem>>, vector<8x16xf32>
    %c0_14 = arith.constant 0 : index
    %c32 = arith.constant 32 : index
    %16 = vector.load %arg19[%c0_14, %c32] : memref<16x96xf32, #tpu.memory_space<vmem>>, vector<8x16xf32>
    %c0_15 = arith.constant 0 : index
    %c64 = arith.constant 64 : index
    %17 = vector.load %arg19[%c0_15, %c64] : memref<16x96xf32, #tpu.memory_space<vmem>>, vector<8x16xf32>
    %18 = arith.truncf %15 : vector<8x16xf32> to vector<8x16xbf16>
    %19 = arith.truncf %16 : vector<8x16xf32> to vector<8x16xbf16>
    %cst_16 = arith.constant dense<0.000000e+00> : vector<8x8xf32>
    %20 = tpu.matmul %18, %19, %cst_16 {dimension_numbers = #tpu.dot_dimension_numbers<[1], [1], [0], [0], [0, 0, 1, 0], [], []>} : vector<8x16xbf16>, vector<8x16xbf16>, vector<8x8xf32> -> vector<8x8xf32>
    %cst_17 = arith.constant 2.500000e-01 : f32
    %21 = vector.broadcast %cst_17 : f32 to vector<8x8xf32>
    %22 = arith.mulf %20, %21 : vector<8x8xf32>
    %23 = vector.broadcast %14 : vector<1x8xf32> to vector<8x8xf32>
    %24 = arith.addf %22, %23 : vector<8x8xf32>
    %cst_18 = arith.constant dense<0xFF800000> : vector<8xf32>
    %25 = vector.multi_reduction <maximumf>, %24, %cst_18 [1] : vector<8x8xf32> to vector<8xf32>
    %26 = vector.shape_cast %25 : vector<8xf32> to vector<8x1xf32>
    %27 = vector.broadcast %26 : vector<8x1xf32> to vector<8x8xf32>
    %28 = arith.subf %24, %27 : vector<8x8xf32>
    %29 = math.exp %28 : vector<8x8xf32>
    %cst_19 = arith.constant dense<0.000000e+00> : vector<8xf32>
    %30 = vector.multi_reduction <add>, %29, %cst_19 [1] : vector<8x8xf32> to vector<8xf32>
    %31 = vector.shape_cast %30 : vector<8xf32> to vector<8x1xf32>
    %32 = tpu.reciprocal %31 {approx = true} : vector<8x1xf32> -> vector<8x1xf32>
    %33 = vector.broadcast %32 : vector<8x1xf32> to vector<8x8xf32>
    %34 = arith.mulf %29, %33 : vector<8x8xf32>
    %35 = arith.truncf %34 : vector<8x8xf32> to vector<8x8xbf16>
    %36 = arith.truncf %17 : vector<8x16xf32> to vector<8x16xbf16>
    %cst_20 = arith.constant dense<0.000000e+00> : vector<8x16xf32>
    %37 = tpu.matmul %35, %36, %cst_20 {dimension_numbers = #tpu.dot_dimension_numbers<[1], [0], [0], [1], [0, 0, 1, 1], [], []>} : vector<8x8xbf16>, vector<8x16xbf16>, vector<8x16xf32> -> vector<8x16xf32>
    %c0_21 = arith.constant 0 : index
    %c0_22 = arith.constant 0 : index
    %38 = vector.load %arg20[%c0_21, %c0_22] : memref<16x32xf32, #tpu.memory_space<vmem>>, vector<8x16xf32>
    tpu.vector_store %arg20[%c0_21, %c0_22], %37 {strides = array<i32>} : memref<16x32xf32, #tpu.memory_space<vmem>>, vector<8x16xf32>,
    %c0_23 = arith.constant 0 : index
    %c16 = arith.constant 16 : index
    %39 = vector.load %arg19[%c0_23, %c16] : memref<16x96xf32, #tpu.memory_space<vmem>>, vector<8x16xf32>
    %c0_24 = arith.constant 0 : index
    %c48 = arith.constant 48 : index
    %40 = vector.load %arg19[%c0_24, %c48] : memref<16x96xf32, #tpu.memory_space<vmem>>, vector<8x16xf32>
    %c0_25 = arith.constant 0 : index
    %c80 = arith.constant 80 : index
    %41 = vector.load %arg19[%c0_25, %c80] : memref<16x96xf32, #tpu.memory_space<vmem>>, vector<8x16xf32>
    %42 = arith.truncf %39 : vector<8x16xf32> to vector<8x16xbf16>
    %43 = arith.truncf %40 : vector<8x16xf32> to vector<8x16xbf16>
    %cst_26 = arith.constant dense<0.000000e+00> : vector<8x8xf32>
    %44 = tpu.matmul %42, %43, %cst_26 {dimension_numbers = #tpu.dot_dimension_numbers<[1], [1], [0], [0], [0, 0, 1, 0], [], []>} : vector<8x16xbf16>, vector<8x16xbf16>, vector<8x8xf32> -> vector<8x8xf32>
    %cst_27 = arith.constant 2.500000e-01 : f32
    %45 = vector.broadcast %cst_27 : f32 to vector<8x8xf32>
    %46 = arith.mulf %44, %45 : vector<8x8xf32>
    %47 = vector.broadcast %14 : vector<1x8xf32> to vector<8x8xf32>
    %48 = arith.addf %46, %47 : vector<8x8xf32>
    %cst_28 = arith.constant dense<0xFF800000> : vector<8xf32>
    %49 = vector.multi_reduction <maximumf>, %48, %cst_28 [1] : vector<8x8xf32> to vector<8xf32>
    %50 = vector.shape_cast %49 : vector<8xf32> to vector<8x1xf32>
    %51 = vector.broadcast %50 : vector<8x1xf32> to vector<8x8xf32>
    %52 = arith.subf %48, %51 : vector<8x8xf32>
    %53 = math.exp %52 : vector<8x8xf32>
    %cst_29 = arith.constant dense<0.000000e+00> : vector<8xf32>
    %54 = vector.multi_reduction <add>, %53, %cst_29 [1] : vector<8x8xf32> to vector<8xf32>
    %55 = vector.shape_cast %54 : vector<8xf32> to vector<8x1xf32>
    %56 = tpu.reciprocal %55 {approx = true} : vector<8x1xf32> -> vector<8x1xf32>
    %57 = vector.broadcast %56 : vector<8x1xf32> to vector<8x8xf32>
    %58 = arith.mulf %53, %57 : vector<8x8xf32>
    %59 = arith.truncf %58 : vector<8x8xf32> to vector<8x8xbf16>
    %60 = arith.truncf %41 : vector<8x16xf32> to vector<8x16xbf16>
    %cst_30 = arith.constant dense<0.000000e+00> : vector<8x16xf32>
    %61 = tpu.matmul %59, %60, %cst_30 {dimension_numbers = #tpu.dot_dimension_numbers<[1], [0], [0], [1], [0, 0, 1, 1], [], []>} : vector<8x8xbf16>, vector<8x16xbf16>, vector<8x16xf32> -> vector<8x16xf32>
    %c0_31 = arith.constant 0 : index
    %c16_32 = arith.constant 16 : index
    %62 = vector.load %arg20[%c0_31, %c16_32] : memref<16x32xf32, #tpu.memory_space<vmem>>, vector<8x16xf32>
    tpu.vector_store %arg20[%c0_31, %c16_32], %61 {strides = array<i32>} : memref<16x32xf32, #tpu.memory_space<vmem>>, vector<8x16xf32>,
    %63 = vector.extract_strided_slice %13 {offsets = [1, 0], sizes = [1, 8], strides = [1, 1]} : vector<2x8xf32> to vector<1x8xf32>
    %c8 = arith.constant 8 : index
    %c0_33 = arith.constant 0 : index
    %64 = vector.load %arg19[%c8, %c0_33] : memref<16x96xf32, #tpu.memory_space<vmem>>, vector<8x16xf32>
    %c8_34 = arith.constant 8 : index
    %c32_35 = arith.constant 32 : index
    %65 = vector.load %arg19[%c8_34, %c32_35] : memref<16x96xf32, #tpu.memory_space<vmem>>, vector<8x16xf32>
    %c8_36 = arith.constant 8 : index
    %c64_37 = arith.constant 64 : index
    %66 = vector.load %arg19[%c8_36, %c64_37] : memref<16x96xf32, #tpu.memory_space<vmem>>, vector<8x16xf32>
    %67 = arith.truncf %64 : vector<8x16xf32> to vector<8x16xbf16>
    %68 = arith.truncf %65 : vector<8x16xf32> to vector<8x16xbf16>
    %cst_38 = arith.constant dense<0.000000e+00> : vector<8x8xf32>
    %69 = tpu.matmul %67, %68, %cst_38 {dimension_numbers = #tpu.dot_dimension_numbers<[1], [1], [0], [0], [0, 0, 1, 0], [], []>} : vector<8x16xbf16>, vector<8x16xbf16>, vector<8x8xf32> -> vector<8x8xf32>
    %cst_39 = arith.constant 2.500000e-01 : f32
    %70 = vector.broadcast %cst_39 : f32 to vector<8x8xf32>
    %71 = arith.mulf %69, %70 : vector<8x8xf32>
    %72 = vector.broadcast %63 : vector<1x8xf32> to vector<8x8xf32>
    %73 = arith.addf %71, %72 : vector<8x8xf32>
    %cst_40 = arith.constant dense<0xFF800000> : vector<8xf32>
    %74 = vector.multi_reduction <maximumf>, %73, %cst_40 [1] : vector<8x8xf32> to vector<8xf32>
    %75 = vector.shape_cast %74 : vector<8xf32> to vector<8x1xf32>
    %76 = vector.broadcast %75 : vector<8x1xf32> to vector<8x8xf32>
    %77 = arith.subf %73, %76 : vector<8x8xf32>
    %78 = math.exp %77 : vector<8x8xf32>
    %cst_41 = arith.constant dense<0.000000e+00> : vector<8xf32>
    %79 = vector.multi_reduction <add>, %78, %cst_41 [1] : vector<8x8xf32> to vector<8xf32>
    %80 = vector.shape_cast %79 : vector<8xf32> to vector<8x1xf32>
    %81 = tpu.reciprocal %80 {approx = true} : vector<8x1xf32> -> vector<8x1xf32>
    %82 = vector.broadcast %81 : vector<8x1xf32> to vector<8x8xf32>
    %83 = arith.mulf %78, %82 : vector<8x8xf32>
    %84 = arith.truncf %83 : vector<8x8xf32> to vector<8x8xbf16>
    %85 = arith.truncf %66 : vector<8x16xf32> to vector<8x16xbf16>
    %cst_42 = arith.constant dense<0.000000e+00> : vector<8x16xf32>
    %86 = tpu.matmul %84, %85, %cst_42 {dimension_numbers = #tpu.dot_dimension_numbers<[1], [0], [0], [1], [0, 0, 1, 1], [], []>} : vector<8x8xbf16>, vector<8x16xbf16>, vector<8x16xf32> -> vector<8x16xf32>
    %c8_43 = arith.constant 8 : index
    %c0_44 = arith.constant 0 : index
    %87 = vector.load %arg20[%c8_43, %c0_44] : memref<16x32xf32, #tpu.memory_space<vmem>>, vector<8x16xf32>
    tpu.vector_store %arg20[%c8_43, %c0_44], %86 {strides = array<i32>} : memref<16x32xf32, #tpu.memory_space<vmem>>, vector<8x16xf32>,
    %c8_45 = arith.constant 8 : index
    %c16_46 = arith.constant 16 : index
    %88 = vector.load %arg19[%c8_45, %c16_46] : memref<16x96xf32, #tpu.memory_space<vmem>>, vector<8x16xf32>
    %c8_47 = arith.constant 8 : index
    %c48_48 = arith.constant 48 : index
    %89 = vector.load %arg19[%c8_47, %c48_48] : memref<16x96xf32, #tpu.memory_space<vmem>>, vector<8x16xf32>
    %c8_49 = arith.constant 8 : index
    %c80_50 = arith.constant 80 : index
    %90 = vector.load %arg19[%c8_49, %c80_50] : memref<16x96xf32, #tpu.memory_space<vmem>>, vector<8x16xf32>
    %91 = arith.truncf %88 : vector<8x16xf32> to vector<8x16xbf16>
    %92 = arith.truncf %89 : vector<8x16xf32> to vector<8x16xbf16>
    %cst_51 = arith.constant dense<0.000000e+00> : vector<8x8xf32>
    %93 = tpu.matmul %91, %92, %cst_51 {dimension_numbers = #tpu.dot_dimension_numbers<[1], [1], [0], [0], [0, 0, 1, 0], [], []>} : vector<8x16xbf16>, vector<8x16xbf16>, vector<8x8xf32> -> vector<8x8xf32>
    %cst_52 = arith.constant 2.500000e-01 : f32
    %94 = vector.broadcast %cst_52 : f32 to vector<8x8xf32>
    %95 = arith.mulf %93, %94 : vector<8x8xf32>
    %96 = vector.broadcast %63 : vector<1x8xf32> to vector<8x8xf32>
    %97 = arith.addf %95, %96 : vector<8x8xf32>
    %cst_53 = arith.constant dense<0xFF800000> : vector<8xf32>
    %98 = vector.multi_reduction <maximumf>, %97, %cst_53 [1] : vector<8x8xf32> to vector<8xf32>
    %99 = vector.shape_cast %98 : vector<8xf32> to vector<8x1xf32>
    %100 = vector.broadcast %99 : vector<8x1xf32> to vector<8x8xf32>
    %101 = arith.subf %97, %100 : vector<8x8xf32>
    %102 = math.exp %101 : vector<8x8xf32>
    %cst_54 = arith.constant dense<0.000000e+00> : vector<8xf32>
    %103 = vector.multi_reduction <add>, %102, %cst_54 [1] : vector<8x8xf32> to vector<8xf32>
    %104 = vector.shape_cast %103 : vector<8xf32> to vector<8x1xf32>
    %105 = tpu.reciprocal %104 {approx = true} : vector<8x1xf32> -> vector<8x1xf32>
    %106 = vector.broadcast %105 : vector<8x1xf32> to vector<8x8xf32>
    %107 = arith.mulf %102, %106 : vector<8x8xf32>
    %108 = arith.truncf %107 : vector<8x8xf32> to vector<8x8xbf16>
    %109 = arith.truncf %90 : vector<8x16xf32> to vector<8x16xbf16>
    %cst_55 = arith.constant dense<0.000000e+00> : vector<8x16xf32>
    %110 = tpu.matmul %108, %109, %cst_55 {dimension_numbers = #tpu.dot_dimension_numbers<[1], [0], [0], [1], [0, 0, 1, 1], [], []>} : vector<8x8xbf16>, vector<8x16xbf16>, vector<8x16xf32> -> vector<8x16xf32>
    %c8_56 = arith.constant 8 : index
    %c16_57 = arith.constant 16 : index
    %111 = vector.load %arg20[%c8_56, %c16_57] : memref<16x32xf32, #tpu.memory_space<vmem>>, vector<8x16xf32>
    tpu.vector_store %arg20[%c8_56, %c16_57], %110 {strides = array<i32>} : memref<16x32xf32, #tpu.memory_space<vmem>>, vector<8x16xf32>,
    %c0_58 = arith.constant 0 : index
    %c0_59 = arith.constant 0 : index
    %112 = vector.load %arg20[%c0_58, %c0_59] : memref<16x32xf32, #tpu.memory_space<vmem>>, vector<16x32xf32>
    %113 = arith.truncf %112 : vector<16x32xf32> to vector<16x32xbf16>
    %c0_60 = arith.constant 0 : index
    %c0_61 = arith.constant 0 : index
    %c0_62 = arith.constant 0 : index
    %114 = vector.load %arg7[%c0_60, %c0_61, %c0_62] : memref<1x32x32xbf16, #tpu.memory_space<vmem>>, vector<1x32x32xbf16>
    %115 = vector.shape_cast %114 : vector<1x32x32xbf16> to vector<32x32xbf16>
    %cst_63 = arith.constant dense<0.000000e+00> : vector<16x32xf32>
    %116 = tpu.matmul %113, %115, %cst_63 {dimension_numbers = #tpu.dot_dimension_numbers<[1], [0], [0], [1], [0, 0, 1, 1], [], []>} : vector<16x32xbf16>, vector<32x32xbf16>, vector<16x32xf32> -> vector<16x32xf32>
    %c0_64 = arith.constant 0 : index
    %c0_65 = arith.constant 0 : index
    %c0_66 = arith.constant 0 : index
    %117 = vector.load %arg8[%c0_64, %c0_65, %c0_66] : memref<1x1x32xf32, #tpu.memory_space<vmem>>, vector<1x1x32xf32>
    %118 = vector.shape_cast %117 : vector<1x1x32xf32> to vector<1x32xf32>
    %119 = vector.broadcast %118 : vector<1x32xf32> to vector<16x32xf32>
    %120 = arith.addf %116, %119 : vector<16x32xf32>
    %121 = arith.addf %3, %120 : vector<16x32xf32>
    %c0_67 = arith.constant 0 : index
    %c0_68 = arith.constant 0 : index
    %c0_69 = arith.constant 0 : index
    %122 = vector.load %arg9[%c0_67, %c0_68, %c0_69] : memref<1x1x32xf32, #tpu.memory_space<vmem>>, vector<1x1x32xf32>
    %123 = vector.shape_cast %122 : vector<1x1x32xf32> to vector<1x32xf32>
    %c0_70 = arith.constant 0 : index
    %c0_71 = arith.constant 0 : index
    %c0_72 = arith.constant 0 : index
    %124 = vector.load %arg10[%c0_70, %c0_71, %c0_72] : memref<1x1x32xf32, #tpu.memory_space<vmem>>, vector<1x1x32xf32>
    %125 = vector.shape_cast %124 : vector<1x1x32xf32> to vector<1x32xf32>
    %cst_73 = arith.constant dense<0.000000e+00> : vector<16xf32>
    %126 = vector.multi_reduction <add>, %121, %cst_73 [1] : vector<16x32xf32> to vector<16xf32>
    %127 = vector.shape_cast %126 : vector<16xf32> to vector<16x1xf32>
    %cst_74 = arith.constant 3.200000e+01 : f32
    %128 = vector.broadcast %cst_74 : f32 to vector<16x1xf32>
    %129 = arith.divf %127, %128 : vector<16x1xf32>
    %130 = vector.broadcast %129 : vector<16x1xf32> to vector<16x32xf32>
    %131 = arith.subf %121, %130 : vector<16x32xf32>
    %132 = arith.mulf %131, %131 : vector<16x32xf32>
    %cst_75 = arith.constant dense<0.000000e+00> : vector<16xf32>
    %133 = vector.multi_reduction <add>, %132, %cst_75 [1] : vector<16x32xf32> to vector<16xf32>
    %134 = vector.shape_cast %133 : vector<16xf32> to vector<16x1xf32>
    %cst_76 = arith.constant 3.200000e+01 : f32
    %135 = vector.broadcast %cst_76 : f32 to vector<16x1xf32>
    %136 = arith.divf %134, %135 : vector<16x1xf32>
    %137 = vector.broadcast %129 : vector<16x1xf32> to vector<16x32xf32>
    %138 = arith.subf %121, %137 : vector<16x32xf32>
    %cst_77 = arith.constant 9.99999996E-13 : f32
    %139 = vector.broadcast %cst_77 : f32 to vector<16x1xf32>
    %140 = arith.addf %136, %139 : vector<16x1xf32>
    %141 = math.rsqrt %140 : vector<16x1xf32>
    %142 = vector.broadcast %141 : vector<16x1xf32> to vector<16x32xf32>
    %143 = arith.mulf %138, %142 : vector<16x32xf32>
    %144 = vector.broadcast %123 : vector<1x32xf32> to vector<16x32xf32>
    %145 = arith.mulf %143, %144 : vector<16x32xf32>
    %146 = vector.broadcast %125 : vector<1x32xf32> to vector<16x32xf32>
    %147 = arith.addf %145, %146 : vector<16x32xf32>
    %148 = arith.truncf %147 : vector<16x32xf32> to vector<16x32xbf16>
    %c0_78 = arith.constant 0 : index
    %c0_79 = arith.constant 0 : index
    %c0_80 = arith.constant 0 : index
    %149 = vector.load %arg11[%c0_78, %c0_79, %c0_80] : memref<1x32x64xbf16, #tpu.memory_space<vmem>>, vector<1x32x64xbf16>
    %150 = vector.shape_cast %149 : vector<1x32x64xbf16> to vector<32x64xbf16>
    %cst_81 = arith.constant dense<0.000000e+00> : vector<16x64xf32>
    %151 = tpu.matmul %148, %150, %cst_81 {dimension_numbers = #tpu.dot_dimension_numbers<[1], [0], [0], [1], [0, 0, 1, 1], [], []>} : vector<16x32xbf16>, vector<32x64xbf16>, vector<16x64xf32> -> vector<16x64xf32>
    %c0_82 = arith.constant 0 : index
    %c0_83 = arith.constant 0 : index
    %c0_84 = arith.constant 0 : index
    %152 = vector.load %arg12[%c0_82, %c0_83, %c0_84] : memref<1x1x64xf32, #tpu.memory_space<vmem>>, vector<1x1x64xf32>
    %153 = vector.shape_cast %152 : vector<1x1x64xf32> to vector<1x64xf32>
    %154 = vector.broadcast %153 : vector<1x64xf32> to vector<16x64xf32>
    %155 = arith.addf %151, %154 : vector<16x64xf32>
    %156 = arith.mulf %155, %155 : vector<16x64xf32>
    %157 = arith.mulf %155, %156 : vector<16x64xf32>
    %cst_85 = arith.constant 4.471500e-02 : f32
    %158 = vector.broadcast %cst_85 : f32 to vector<16x64xf32>
    %159 = arith.mulf %158, %157 : vector<16x64xf32>
    %160 = arith.addf %155, %159 : vector<16x64xf32>
    %cst_86 = arith.constant 0.797884583 : f32
    %161 = vector.broadcast %cst_86 : f32 to vector<16x64xf32>
    %162 = arith.mulf %161, %160 : vector<16x64xf32>
    %163 = math.tanh %162 : vector<16x64xf32>
    %cst_87 = arith.constant 1.000000e+00 : f32
    %164 = vector.broadcast %cst_87 : f32 to vector<16x64xf32>
    %165 = arith.addf %164, %163 : vector<16x64xf32>
    %cst_88 = arith.constant 5.000000e-01 : f32
    %166 = vector.broadcast %cst_88 : f32 to vector<16x64xf32>
    %167 = arith.mulf %166, %165 : vector<16x64xf32>
    %168 = arith.mulf %155, %167 : vector<16x64xf32>
    %169 = arith.truncf %168 : vector<16x64xf32> to vector<16x64xbf16>
    %c0_89 = arith.constant 0 : index
    %c0_90 = arith.constant 0 : index
    %c0_91 = arith.constant 0 : index
    %170 = vector.load %arg13[%c0_89, %c0_90, %c0_91] : memref<1x64x32xbf16, #tpu.memory_space<vmem>>, vector<1x64x32xbf16>
    %171 = vector.shape_cast %170 : vector<1x64x32xbf16> to vector<64x32xbf16>
    %cst_92 = arith.constant dense<0.000000e+00> : vector<16x32xf32>
    %172 = tpu.matmul %169, %171, %cst_92 {dimension_numbers = #tpu.dot_dimension_numbers<[1], [0], [0], [1], [0, 0, 1, 1], [], []>} : vector<16x64xbf16>, vector<64x32xbf16>, vector<16x32xf32> -> vector<16x32xf32>
    %c0_93 = arith.constant 0 : index
    %c0_94 = arith.constant 0 : index
    %c0_95 = arith.constant 0 : index
    %173 = vector.load %arg14[%c0_93, %c0_94, %c0_95] : memref<1x1x32xf32, #tpu.memory_space<vmem>>, vector<1x1x32xf32>
    %174 = vector.shape_cast %173 : vector<1x1x32xf32> to vector<1x32xf32>
    %175 = vector.broadcast %174 : vector<1x32xf32> to vector<16x32xf32>
    %176 = arith.addf %172, %175 : vector<16x32xf32>
    %177 = arith.addf %147, %176 : vector<16x32xf32>
    %c0_96 = arith.constant 0 : index
    %c0_97 = arith.constant 0 : index
    %c0_98 = arith.constant 0 : index
    %178 = vector.load %arg15[%c0_96, %c0_97, %c0_98] : memref<1x1x32xf32, #tpu.memory_space<vmem>>, vector<1x1x32xf32>
    %179 = vector.shape_cast %178 : vector<1x1x32xf32> to vector<1x32xf32>
    %c0_99 = arith.constant 0 : index
    %c0_100 = arith.constant 0 : index
    %c0_101 = arith.constant 0 : index
    %180 = vector.load %arg16[%c0_99, %c0_100, %c0_101] : memref<1x1x32xf32, #tpu.memory_space<vmem>>, vector<1x1x32xf32>
    %181 = vector.shape_cast %180 : vector<1x1x32xf32> to vector<1x32xf32>
    %cst_102 = arith.constant dense<0.000000e+00> : vector<16xf32>
    %182 = vector.multi_reduction <add>, %177, %cst_102 [1] : vector<16x32xf32> to vector<16xf32>
    %183 = vector.shape_cast %182 : vector<16xf32> to vector<16x1xf32>
    %cst_103 = arith.constant 3.200000e+01 : f32
    %184 = vector.broadcast %cst_103 : f32 to vector<16x1xf32>
    %185 = arith.divf %183, %184 : vector<16x1xf32>
    %186 = vector.broadcast %185 : vector<16x1xf32> to vector<16x32xf32>
    %187 = arith.subf %177, %186 : vector<16x32xf32>
    %188 = arith.mulf %187, %187 : vector<16x32xf32>
    %cst_104 = arith.constant dense<0.000000e+00> : vector<16xf32>
    %189 = vector.multi_reduction <add>, %188, %cst_104 [1] : vector<16x32xf32> to vector<16xf32>
    %190 = vector.shape_cast %189 : vector<16xf32> to vector<16x1xf32>
    %cst_105 = arith.constant 3.200000e+01 : f32
    %191 = vector.broadcast %cst_105 : f32 to vector<16x1xf32>
    %192 = arith.divf %190, %191 : vector<16x1xf32>
    %193 = vector.broadcast %185 : vector<16x1xf32> to vector<16x32xf32>
    %194 = arith.subf %177, %193 : vector<16x32xf32>
    %cst_106 = arith.constant 9.99999996E-13 : f32
    %195 = vector.broadcast %cst_106 : f32 to vector<16x1xf32>
    %196 = arith.addf %192, %195 : vector<16x1xf32>
    %197 = math.rsqrt %196 : vector<16x1xf32>
    %198 = vector.broadcast %197 : vector<16x1xf32> to vector<16x32xf32>
    %199 = arith.mulf %194, %198 : vector<16x32xf32>
    %200 = vector.broadcast %179 : vector<1x32xf32> to vector<16x32xf32>
    %201 = arith.mulf %199, %200 : vector<16x32xf32>
    %202 = vector.broadcast %181 : vector<1x32xf32> to vector<16x32xf32>
    %203 = arith.addf %201, %202 : vector<16x32xf32>
    %c0_107 = arith.constant 0 : index
    %c0_108 = arith.constant 0 : index
    %204 = vector.load %arg18[%c0_107, %c0_108] : memref<16x32xf32, #tpu.memory_space<vmem>>, vector<16x32xf32>
    tpu.vector_store %arg18[%c0_107, %c0_108], %203 {strides = array<i32>} : memref<16x32xf32, #tpu.memory_space<vmem>>, vector<16x32xf32>,
    %c1_i32 = arith.constant 1 : i32
    %205 = arith.cmpi eq, %arg0, %c1_i32 : i32
    %206 = arith.extui %205 : i1 to i32
    %c0_i32_109 = arith.constant 0 : i32
    %207 = arith.cmpi ne, %206, %c0_i32_109 : i32
    scf.if %207 {
      %c0_110 = arith.constant 0 : index
      %c0_111 = arith.constant 0 : index
      %208 = vector.load %arg17[%c0_110, %c0_111] : memref<16x32xf32, #tpu.memory_space<vmem>>, vector<16x32xf32>
      tpu.vector_store %arg17[%c0_110, %c0_111], %203 {strides = array<i32>} : memref<16x32xf32, #tpu.memory_space<vmem>>, vector<16x32xf32>,
    } else {
    }
    return
  }
  func.func @transform_0(%arg0: i32) -> (i32, i32) {
    %c0_i32 = arith.constant 0 : i32
    %c0_i32_0 = arith.constant 0 : i32
    %c0_i32_1 = arith.constant 0 : i32
    return %c0_i32, %c0_i32_0 : i32, i32
  }
  func.func @transform_1(%arg0: i32) -> (i32, i32) {
    %c0_i32 = arith.constant 0 : i32
    %c0_i32_0 = arith.constant 0 : i32
    %c0_i32_1 = arith.constant 0 : i32
    return %c0_i32, %c0_i32_0 : i32, i32
  }
  func.func @transform_2(%arg0: i32) -> (i32, i32) {
    %c0_i32 = arith.constant 0 : i32
    %c0_i32_0 = arith.constant 0 : i32
    %c0_i32_1 = arith.constant 0 : i32
    return %c0_i32, %c0_i32_0 : i32, i32
  }
  func.func @transform_3(%arg0: i32) -> (i32, i32) {
    %c0_i32 = arith.constant 0 : i32
    %c0_i32_0 = arith.constant 0 : i32
    %c0_i32_1 = arith.constant 0 : i32
    return %c0_i32, %c0_i32_0 : i32, i32
  }
  func.func @transform_4(%arg0: i32) -> (i32, i32, i32) {
    %c0_i32 = arith.constant 0 : i32
    %c0_i32_0 = arith.constant 0 : i32
    %c0_i32_1 = arith.constant 0 : i32
    return %arg0, %c0_i32, %c0_i32_0 : i32, i32, i32
  }
  func.func @transform_5(%arg0: i32) -> (i32, i32, i32) {
    %c0_i32 = arith.constant 0 : i32
    %c0_i32_0 = arith.constant 0 : i32
    %c0_i32_1 = arith.constant 0 : i32
    return %arg0, %c0_i32, %c0_i32_0 : i32, i32, i32
  }
  func.func @transform_6(%arg0: i32) -> (i32, i32, i32) {
    %c0_i32 = arith.constant 0 : i32
    %c0_i32_0 = arith.constant 0 : i32
    %c0_i32_1 = arith.constant 0 : i32
    return %arg0, %c0_i32, %c0_i32_0 : i32, i32, i32
  }
  func.func @transform_7(%arg0: i32) -> (i32, i32, i32) {
    %c0_i32 = arith.constant 0 : i32
    %c0_i32_0 = arith.constant 0 : i32
    %c0_i32_1 = arith.constant 0 : i32
    return %arg0, %c0_i32, %c0_i32_0 : i32, i32, i32
  }
  func.func @transform_8(%arg0: i32) -> (i32, i32, i32) {
    %c0_i32 = arith.constant 0 : i32
    %c0_i32_0 = arith.constant 0 : i32
    %c0_i32_1 = arith.constant 0 : i32
    return %arg0, %c0_i32, %c0_i32_0 : i32, i32, i32
  }
  func.func @transform_9(%arg0: i32) -> (i32, i32, i32) {
    %c0_i32 = arith.constant 0 : i32
    %c0_i32_0 = arith.constant 0 : i32
    %c0_i32_1 = arith.constant 0 : i32
    return %arg0, %c0_i32, %c0_i32_0 : i32, i32, i32
  }
  func.func @transform_10(%arg0: i32) -> (i32, i32, i32) {
    %c0_i32 = arith.constant 0 : i32
    %c0_i32_0 = arith.constant 0 : i32
    %c0_i32_1 = arith.constant 0 : i32
    return %arg0, %c0_i32, %c0_i32_0 : i32, i32, i32
  }
  func.func @transform_11(%arg0: i32) -> (i32, i32, i32) {
    %c0_i32 = arith.constant 0 : i32
    %c0_i32_0 = arith.constant 0 : i32
    %c0_i32_1 = arith.constant 0 : i32
    return %arg0, %c0_i32, %c0_i32_0 : i32, i32, i32
  }
  func.func @transform_12(%arg0: i32) -> (i32, i32, i32) {
    %c0_i32 = arith.constant 0 : i32
    %c0_i32_0 = arith.constant 0 : i32
    %c0_i32_1 = arith.constant 0 : i32
    return %arg0, %c0_i32, %c0_i32_0 : i32, i32, i32
  }
  func.func @transform_13(%arg0: i32) -> (i32, i32, i32) {
    %c0_i32 = arith.constant 0 : i32
    %c0_i32_0 = arith.constant 0 : i32
    %c0_i32_1 = arith.constant 0 : i32
    return %arg0, %c0_i32, %c0_i32_0 : i32, i32, i32
  }
  func.func @transform_14(%arg0: i32) -> (i32, i32, i32) {
    %c0_i32 = arith.constant 0 : i32
    %c0_i32_0 = arith.constant 0 : i32
    %c0_i32_1 = arith.constant 0 : i32
    return %arg0, %c0_i32, %c0_i32_0 : i32, i32, i32
  }
  func.func @transform_15(%arg0: i32) -> (i32, i32, i32) {
    %c0_i32 = arith.constant 0 : i32
    %c0_i32_0 = arith.constant 0 : i32
    %c0_i32_1 = arith.constant 0 : i32
    return %arg0, %c0_i32, %c0_i32_0 : i32, i32, i32
  }
  func.func @transform_16(%arg0: i32) -> (i32, i32) {
    %c0_i32 = arith.constant 0 : i32
    %c0_i32_0 = arith.constant 0 : i32
    %c0_i32_1 = arith.constant 0 : i32
    return %c0_i32, %c0_i32_0 : i32, i32
  }
}

</mosaic_0001>

<llo_original>
// kernel: tpu_custom_call.1
$region0: #{tpu_custom_call.1}
  #allocation0 [shape = 'u32[]', space=smem, size = 0x4, offset = 0x4, fixed_abs, tag = 'smem constant byte address 0x4 - core index']
  #allocation1 [shape = 'u32[144,128]{1,0:T(1,128)}', space=vmem, size = 0x12000, scoped, tag = 'internal scratch']
  #allocation2 [shape = 'f32[16,32]{1,0:T(8,128)}', space=vmem, size = 0x2000, scoped, tag = 'scratch operand']
  #allocation3 [shape = 'f32[16,96]{1,0:T(8,128)}', space=vmem, size = 0x2000, scoped, tag = 'scratch operand']
  #allocation4 [shape = 'f32[16,32]{1,0:T(8,128)}', space=vmem, size = 0x2000, scoped, tag = 'scratch operand']
  %s0 = inlined_call_operand.hbm [shape: f32[16,32], index: 0, kind: input, shape index: {}]
  %s1 = inlined_call_operand.vmem [shape: f32[2,8], index: 1, kind: input, shape index: {}]
  %s2 = inlined_call_operand.vmem [shape: f32[1,32], index: 2, kind: input, shape index: {}]
  %s3 = inlined_call_operand.hbm [shape: f32[1,32], index: 3, kind: input, shape index: {}]
  %s4 = inlined_call_operand.vmem [shape: bf16[2,32,96], index: 4, kind: input, shape index: {}]
  %s5 = inlined_call_operand.vmem [shape: f32[2,1,96], index: 5, kind: input, shape index: {}]
  %s6 = inlined_call_operand.vmem [shape: bf16[2,32,32], index: 6, kind: input, shape index: {}]
  %s7 = inlined_call_operand.vmem [shape: f32[2,1,32], index: 7, kind: input, shape index: {}]
  %s8 = inlined_call_operand.vmem [shape: f32[2,1,32], index: 8, kind: input, shape index: {}]
  %s9 = inlined_call_operand.vmem [shape: f32[2,1,32], index: 9, kind: input, shape index: {}]
  %s10 = inlined_call_operand.vmem [shape: bf16[2,32,64], index: 10, kind: input, shape index: {}]
  %s11 = inlined_call_operand.vmem [shape: f32[2,1,64], index: 11, kind: input, shape index: {}]
  %s12 = inlined_call_operand.vmem [shape: bf16[2,64,32], index: 12, kind: input, shape index: {}]
  %s13 = inlined_call_operand.vmem [shape: f32[2,1,32], index: 13, kind: input, shape index: {}]
  %s14 = inlined_call_operand.vmem [shape: f32[2,1,32], index: 14, kind: input, shape index: {}]
  %s15 = inlined_call_operand.vmem [shape: f32[2,1,32], index: 15, kind: input, shape index: {}]
  %s16 = inlined_call_operand.hbm [shape: f32[16,32], index: 16, kind: output, shape index: {}]
  %s17 = sld [smem:[#allocation0]]
  $region113: #{tpu_custom_call.1} parent=0
    _
  %s19 = ssub.s32 1, %s17
  %s20 = scalar_select 0, %s19, %s17
  $region1: #{tpu_custom_call.1} parent=0
    #allocation5 [shape = 'u8[8192]{0}', space=vmem, size = 0x2000, scoped, tag = 'input window, operand 0, single buffered']
    #allocation6 [shape = 's32[2]{0}', space=sflag, size = 0x8, scoped, tag = 'scoped memory for tpu_custom_call.1']
    #allocation7 [shape = 's32[2]{0}', space=sflag, size = 0x8, scoped, tag = 'scoped memory for tpu_custom_call.1']
    #allocation8 [shape = 'u8[512]{0}', space=vmem, size = 0x400, scoped, tag = 'input window, operand 3, single buffered']
    #allocation9 [shape = 's32[1]{0}', space=sflag, size = 0x4, scoped, tag = 'scoped memory for tpu_custom_call.1']
    #allocation10 [shape = 'u8[8192]{0}', space=vmem, size = 0x2000, scoped, tag = 'output window, operand 0, single buffered']
    %21 = vsyncpa [#allocation6], 0
    %22 = vsyncpa [#allocation9], 0
    %23 = vsyncpa [#allocation7], 0
    loop: start=0, step=1, limit=4
    $region2: #{tpu_custom_call.1} parent=1 // loop_pre_header
      _
    $region3: #{tpu_custom_call.1} parent=1 // loop_header
      %s25 = sphi 0, %s29
      %p26 = scmp.ge.s32.totalorder %s25, 4
      %s33 = sphi 0, %s33
      %s35 = sphi 0, %s33
      %s36 = sphi 0, %s35
      %s50 = sphi 0, %s36
      %s54 = sphi 0, %s54
      %s56 = sphi 0, %s54
      %s57 = sphi 0, %s56
      %s71 = sphi 0, %s57
      %s75 = sphi 0, %s75
      %s77 = sphi 0, %s75
      %s78 = sphi 0, %s77
      %s92 = sphi 0, %s78
      %s96 = sphi 0, %s96
      %s98 = sphi 0, %s96
      %s99 = sphi 0, %s98
      %s113 = sphi 0, %s99
      %s119 = sphi 0, %s121
      %s122 = sphi 0, %s119
      %s123 = sphi 0, %s122
      %s139 = sphi 0, %s123
      %s145 = sphi 0, %s147
      %s148 = sphi 0, %s145
      %s149 = sphi 0, %s148
      %s165 = sphi 0, %s149
      %s171 = sphi 0, %s173
      %s174 = sphi 0, %s171
      %s175 = sphi 0, %s174
      %s191 = sphi 0, %s175
      %s197 = sphi 0, %s199
      %s200 = sphi 0, %s197
      %s201 = sphi 0, %s200
      %s217 = sphi 0, %s201
      %s223 = sphi 0, %s225
      %s226 = sphi 0, %s223
      %s227 = sphi 0, %s226
      %s243 = sphi 0, %s227
      %s249 = sphi 0, %s251
      %s252 = sphi 0, %s249
      %s253 = sphi 0, %s252
      %s269 = sphi 0, %s253
      %s275 = sphi 0, %s277
      %s278 = sphi 0, %s275
      %s279 = sphi 0, %s278
      %s295 = sphi 0, %s279
      %s301 = sphi 0, %s303
      %s304 = sphi 0, %s301
      %s305 = sphi 0, %s304
      %s321 = sphi 0, %s305
      %s327 = sphi 0, %s329
      %s330 = sphi 0, %s327
      %s331 = sphi 0, %s330
      %s347 = sphi 0, %s331
      %s353 = sphi 0, %s355
      %s356 = sphi 0, %s353
      %s357 = sphi 0, %s356
      %s373 = sphi 0, %s357
      %s379 = sphi 0, %s381
      %s382 = sphi 0, %s379
      %s383 = sphi 0, %s382
      %s399 = sphi 0, %s383
      %s405 = sphi 0, %s407
      %s408 = sphi 0, %s405
      %s409 = sphi 0, %s408
      %s425 = sphi 0, %s409
      %s429 = sphi 0, %s429
      %s431 = sphi 0, %s429
      %s432 = sphi 0, %s431
      %s446 = sphi 0, %s432
    $region4: #{tpu_custom_call.1} parent=1 // loop_header_branch
      %28 = sbr.rel (%p26) target = $region8
    $region5: #{tpu_custom_call.1} parent=1 // loop_body
      %s30 = ssub.s32 %s25, 1
      %s31 = ssub.s32 %s25, 2
      %s32 = sadd.s32 %s25, 1
      %s34 = sadd.s32 %s33, 1
      %p37 = scmp.eq.s32.totalorder %s25, 1
      %p38 = scmp.ne.s32.totalorder %s33, %s35
      %p39 = scmp.eq.s32.totalorder %s25, 0
      %p40 = por %p38, %p39
      %p41 = scmp.ne.s32.totalorder %s33, %s35
      %p42 = scmp.eq.s32.totalorder %s30, 1
      %p43 = por %p41, %p42
      %p44 = scmp.ne.s32.totalorder %s35, %s36
      %p45 = scmp.eq.s32.totalorder %s30, 0
      %p46 = por %p44, %p45
      %p47 = scmp.ne.s32.totalorder %s35, %s36
      %p48 = scmp.eq.s32.totalorder %s31, 1
      %p49 = por %p47, %p48
      %p51 = scmp.ne.s32.totalorder %s36, %s50
      %p52 = scmp.eq.s32.totalorder %s31, 0
      %p53 = por %p51, %p52
      %s55 = sadd.s32 %s54, 1
      %p58 = scmp.eq.s32.totalorder %s25, 1
      %p59 = scmp.ne.s32.totalorder %s54, %s56
      %p60 = scmp.eq.s32.totalorder %s25, 0
      %p61 = por %p59, %p60
      %p62 = scmp.ne.s32.totalorder %s54, %s56
      %p63 = scmp.eq.s32.totalorder %s30, 1
      %p64 = por %p62, %p63
      %p65 = scmp.ne.s32.totalorder %s56, %s57
      %p66 = scmp.eq.s32.totalorder %s30, 0
      %p67 = por %p65, %p66
      %p68 = scmp.ne.s32.totalorder %s56, %s57
      %p69 = scmp.eq.s32.totalorder %s31, 1
      %p70 = por %p68, %p69
      %p72 = scmp.ne.s32.totalorder %s57, %s71
      %p73 = scmp.eq.s32.totalorder %s31, 0
      %p74 = por %p72, %p73
      %s76 = sadd.s32 %s75, 1
      %p79 = scmp.eq.s32.totalorder %s25, 1
      %p80 = scmp.ne.s32.totalorder %s75, %s77
      %p81 = scmp.eq.s32.totalorder %s25, 0
      %p82 = por %p80, %p81
      %p83 = scmp.ne.s32.totalorder %s75, %s77
      %p84 = scmp.eq.s32.totalorder %s30, 1
      %p85 = por %p83, %p84
      %p86 = scmp.ne.s32.totalorder %s77, %s78
      %p87 = scmp.eq.s32.totalorder %s30, 0
      %p88 = por %p86, %p87
      %p89 = scmp.ne.s32.totalorder %s77, %s78
      %p90 = scmp.eq.s32.totalorder %s31, 1
      %p91 = por %p89, %p90
      %p93 = scmp.ne.s32.totalorder %s78, %s92
      %p94 = scmp.eq.s32.totalorder %s31, 0
      %p95 = por %p93, %p94
      %s97 = sadd.s32 %s96, 1
      %p100 = scmp.eq.s32.totalorder %s25, 1
      %p101 = scmp.ne.s32.totalorder %s96, %s98
      %p102 = scmp.eq.s32.totalorder %s25, 0
      %p103 = por %p101, %p102
      %p104 = scmp.ne.s32.totalorder %s96, %s98
      %p105 = scmp.eq.s32.totalorder %s30, 1
      %p106 = por %p104, %p105
      %p107 = scmp.ne.s32.totalorder %s98, %s99
      %p108 = scmp.eq.s32.totalorder %s30, 0
      %p109 = por %p107, %p108
      %p110 = scmp.ne.s32.totalorder %s98, %s99
      %p111 = scmp.eq.s32.totalorder %s31, 1
      %p112 = por %p110, %p111
      %p114 = scmp.ne.s32.totalorder %s99, %s113
      %p115 = scmp.eq.s32.totalorder %s31, 0
      %p116 = por %p114, %p115
      %s117 = ssub.s32 %s25, %s32
      %p118 = scmp.eq.s32.totalorder %s117, 0
      %s120 = sadd.s32 %s119, 1
      %s121 = scalar_select %p118, %s119, %s120
      %p124 = pneg %p118
      %p125 = scmp.eq.s32.totalorder %s25, 1
      %p126 = por %p124, %p125
      %p127 = scmp.ne.s32.totalorder %s119, %s122
      %p128 = scmp.eq.s32.totalorder %s25, 0
      %p129 = por %p127, %p128
      %p130 = scmp.ne.s32.totalorder %s119, %s122
      %p131 = scmp.eq.s32.totalorder %s30, 1
      %p132 = por %p130, %p131
      %p133 = scmp.ne.s32.totalorder %s122, %s123
      %p134 = scmp.eq.s32.totalorder %s30, 0
      %p135 = por %p133, %p134
      %p136 = scmp.ne.s32.totalorder %s122, %s123
      %p137 = scmp.eq.s32.totalorder %s31, 1
      %p138 = por %p136, %p137
      %p140 = scmp.ne.s32.totalorder %s123, %s139
      %p141 = scmp.eq.s32.totalorder %s31, 0
      %p142 = por %p140, %p141
      %s143 = ssub.s32 %s25, %s32
      %p144 = scmp.eq.s32.totalorder %s143, 0
      %s146 = sadd.s32 %s145, 1
      %s147 = scalar_select %p144, %s145, %s146
      %p150 = pneg %p144
      %p151 = scmp.eq.s32.totalorder %s25, 1
      %p152 = por %p150, %p151
      %p153 = scmp.ne.s32.totalorder %s145, %s148
      %p154 = scmp.eq.s32.totalorder %s25, 0
      %p155 = por %p153, %p154
      %p156 = scmp.ne.s32.totalorder %s145, %s148
      %p157 = scmp.eq.s32.totalorder %s30, 1
      %p158 = por %p156, %p157
      %p159 = scmp.ne.s32.totalorder %s148, %s149
      %p160 = scmp.eq.s32.totalorder %s30, 0
      %p161 = por %p159, %p160
      %p162 = scmp.ne.s32.totalorder %s148, %s149
      %p163 = scmp.eq.s32.totalorder %s31, 1
      %p164 = por %p162, %p163
      %p166 = scmp.ne.s32.totalorder %s149, %s165
      %p167 = scmp.eq.s32.totalorder %s31, 0
      %p168 = por %p166, %p167
      %s169 = ssub.s32 %s25, %s32
      %p170 = scmp.eq.s32.totalorder %s169, 0
      %s172 = sadd.s32 %s171, 1
      %s173 = scalar_select %p170, %s171, %s172
      %p176 = pneg %p170
      %p177 = scmp.eq.s32.totalorder %s25, 1
      %p178 = por %p176, %p177
      %p179 = scmp.ne.s32.totalorder %s171, %s174
      %p180 = scmp.eq.s32.totalorder %s25, 0
      %p181 = por %p179, %p180
      %p182 = scmp.ne.s32.totalorder %s171, %s174
      %p183 = scmp.eq.s32.totalorder %s30, 1
      %p184 = por %p182, %p183
      %p185 = scmp.ne.s32.totalorder %s174, %s175
      %p186 = scmp.eq.s32.totalorder %s30, 0
      %p187 = por %p185, %p186
      %p188 = scmp.ne.s32.totalorder %s174, %s175
      %p189 = scmp.eq.s32.totalorder %s31, 1
      %p190 = por %p188, %p189
      %p192 = scmp.ne.s32.totalorder %s175, %s191
      %p193 = scmp.eq.s32.totalorder %s31, 0
      %p194 = por %p192, %p193
      %s195 = ssub.s32 %s25, %s32
      %p196 = scmp.eq.s32.totalorder %s195, 0
      %s198 = sadd.s32 %s197, 1
      %s199 = scalar_select %p196, %s197, %s198
      %p202 = pneg %p196
      %p203 = scmp.eq.s32.totalorder %s25, 1
      %p204 = por %p202, %p203
      %p205 = scmp.ne.s32.totalorder %s197, %s200
      %p206 = scmp.eq.s32.totalorder %s25, 0
      %p207 = por %p205, %p206
      %p208 = scmp.ne.s32.totalorder %s197, %s200
      %p209 = scmp.eq.s32.totalorder %s30, 1
      %p210 = por %p208, %p209
      %p211 = scmp.ne.s32.totalorder %s200, %s201
      %p212 = scmp.eq.s32.totalorder %s30, 0
      %p213 = por %p211, %p212
      %p214 = scmp.ne.s32.totalorder %s200, %s201
      %p215 = scmp.eq.s32.totalorder %s31, 1
      %p216 = por %p214, %p215
      %p218 = scmp.ne.s32.totalorder %s201, %s217
      %p219 = scmp.eq.s32.totalorder %s31, 0
      %p220 = por %p218, %p219
      %s221 = ssub.s32 %s25, %s32
      %p222 = scmp.eq.s32.totalorder %s221, 0
      %s224 = sadd.s32 %s223, 1
      %s225 = scalar_select %p222, %s223, %s224
      %p228 = pneg %p222
      %p229 = scmp.eq.s32.totalorder %s25, 1
      %p230 = por %p228, %p229
      %p231 = scmp.ne.s32.totalorder %s223, %s226
      %p232 = scmp.eq.s32.totalorder %s25, 0
      %p233 = por %p231, %p232
      %p234 = scmp.ne.s32.totalorder %s223, %s226
      %p235 = scmp.eq.s32.totalorder %s30, 1
      %p236 = por %p234, %p235
      %p237 = scmp.ne.s32.totalorder %s226, %s227
      %p238 = scmp.eq.s32.totalorder %s30, 0
      %p239 = por %p237, %p238
      %p240 = scmp.ne.s32.totalorder %s226, %s227
      %p241 = scmp.eq.s32.totalorder %s31, 1
      %p242 = por %p240, %p241
      %p244 = scmp.ne.s32.totalorder %s227, %s243
      %p245 = scmp.eq.s32.totalorder %s31, 0
      %p246 = por %p244, %p245
      %s247 = ssub.s32 %s25, %s32
      %p248 = scmp.eq.s32.totalorder %s247, 0
      %s250 = sadd.s32 %s249, 1
      %s251 = scalar_select %p248, %s249, %s250
      %p254 = pneg %p248
      %p255 = scmp.eq.s32.totalorder %s25, 1
      %p256 = por %p254, %p255
      %p257 = scmp.ne.s32.totalorder %s249, %s252
      %p258 = scmp.eq.s32.totalorder %s25, 0
      %p259 = por %p257, %p258
      %p260 = scmp.ne.s32.totalorder %s249, %s252
      %p261 = scmp.eq.s32.totalorder %s30, 1
      %p262 = por %p260, %p261
      %p263 = scmp.ne.s32.totalorder %s252, %s253
      %p264 = scmp.eq.s32.totalorder %s30, 0
      %p265 = por %p263, %p264
      %p266 = scmp.ne.s32.totalorder %s252, %s253
      %p267 = scmp.eq.s32.totalorder %s31, 1
      %p268 = por %p266, %p267
      %p270 = scmp.ne.s32.totalorder %s253, %s269
      %p271 = scmp.eq.s32.totalorder %s31, 0
      %p272 = por %p270, %p271
      %s273 = ssub.s32 %s25, %s32
      %p274 = scmp.eq.s32.totalorder %s273, 0
      %s276 = sadd.s32 %s275, 1
      %s277 = scalar_select %p274, %s275, %s276
      %p280 = pneg %p274
      %p281 = scmp.eq.s32.totalorder %s25, 1
      %p282 = por %p280, %p281
      %p283 = scmp.ne.s32.totalorder %s275, %s278
      %p284 = scmp.eq.s32.totalorder %s25, 0
      %p285 = por %p283, %p284
      %p286 = scmp.ne.s32.totalorder %s275, %s278
      %p287 = scmp.eq.s32.totalorder %s30, 1
      %p288 = por %p286, %p287
      %p289 = scmp.ne.s32.totalorder %s278, %s279
      %p290 = scmp.eq.s32.totalorder %s30, 0
      %p291 = por %p289, %p290
      %p292 = scmp.ne.s32.totalorder %s278, %s279
      %p293 = scmp.eq.s32.totalorder %s31, 1
      %p294 = por %p292, %p293
      %p296 = scmp.ne.s32.totalorder %s279, %s295
      %p297 = scmp.eq.s32.totalorder %s31, 0
      %p298 = por %p296, %p297
      %s299 = ssub.s32 %s25, %s32
      %p300 = scmp.eq.s32.totalorder %s299, 0
      %s302 = sadd.s32 %s301, 1
      %s303 = scalar_select %p300, %s301, %s302
      %p306 = pneg %p300
      %p307 = scmp.eq.s32.totalorder %s25, 1
      %p308 = por %p306, %p307
      %p309 = scmp.ne.s32.totalorder %s301, %s304
      %p310 = scmp.eq.s32.totalorder %s25, 0
      %p311 = por %p309, %p310
      %p312 = scmp.ne.s32.totalorder %s301, %s304
      %p313 = scmp.eq.s32.totalorder %s30, 1
      %p314 = por %p312, %p313
      %p315 = scmp.ne.s32.totalorder %s304, %s305
      %p316 = scmp.eq.s32.totalorder %s30, 0
      %p317 = por %p315, %p316
      %p318 = scmp.ne.s32.totalorder %s304, %s305
      %p319 = scmp.eq.s32.totalorder %s31, 1
      %p320 = por %p318, %p319
      %p322 = scmp.ne.s32.totalorder %s305, %s321
      %p323 = scmp.eq.s32.totalorder %s31, 0
      %p324 = por %p322, %p323
      %s325 = ssub.s32 %s25, %s32
      %p326 = scmp.eq.s32.totalorder %s325, 0
      %s328 = sadd.s32 %s327, 1
      %s329 = scalar_select %p326, %s327, %s328
      %p332 = pneg %p326
      %p333 = scmp.eq.s32.totalorder %s25, 1
      %p334 = por %p332, %p333
      %p335 = scmp.ne.s32.totalorder %s327, %s330
      %p336 = scmp.eq.s32.totalorder %s25, 0
      %p337 = por %p335, %p336
      %p338 = scmp.ne.s32.totalorder %s327, %s330
      %p339 = scmp.eq.s32.totalorder %s30, 1
      %p340 = por %p338, %p339
      %p341 = scmp.ne.s32.totalorder %s330, %s331
      %p342 = scmp.eq.s32.totalorder %s30, 0
      %p343 = por %p341, %p342
      %p344 = scmp.ne.s32.totalorder %s330, %s331
      %p345 = scmp.eq.s32.totalorder %s31, 1
      %p346 = por %p344, %p345
      %p348 = scmp.ne.s32.totalorder %s331, %s347
      %p349 = scmp.eq.s32.totalorder %s31, 0
      %p350 = por %p348, %p349
      %s351 = ssub.s32 %s25, %s32
      %p352 = scmp.eq.s32.totalorder %s351, 0
      %s354 = sadd.s32 %s353, 1
      %s355 = scalar_select %p352, %s353, %s354
      %p358 = pneg %p352
      %p359 = scmp.eq.s32.totalorder %s25, 1
      %p360 = por %p358, %p359
      %p361 = scmp.ne.s32.totalorder %s353, %s356
      %p362 = scmp.eq.s32.totalorder %s25, 0
      %p363 = por %p361, %p362
      %p364 = scmp.ne.s32.totalorder %s353, %s356
      %p365 = scmp.eq.s32.totalorder %s30, 1
      %p366 = por %p364, %p365
      %p367 = scmp.ne.s32.totalorder %s356, %s357
      %p368 = scmp.eq.s32.totalorder %s30, 0
      %p369 = por %p367, %p368
      %p370 = scmp.ne.s32.totalorder %s356, %s357
      %p371 = scmp.eq.s32.totalorder %s31, 1
      %p372 = por %p370, %p371
      %p374 = scmp.ne.s32.totalorder %s357, %s373
      %p375 = scmp.eq.s32.totalorder %s31, 0
      %p376 = por %p374, %p375
      %s377 = ssub.s32 %s25, %s32
      %p378 = scmp.eq.s32.totalorder %s377, 0
      %s380 = sadd.s32 %s379, 1
      %s381 = scalar_select %p378, %s379, %s380
      %p384 = pneg %p378
      %p385 = scmp.eq.s32.totalorder %s25, 1
      %p386 = por %p384, %p385
      %p387 = scmp.ne.s32.totalorder %s379, %s382
      %p388 = scmp.eq.s32.totalorder %s25, 0
      %p389 = por %p387, %p388
      %p390 = scmp.ne.s32.totalorder %s379, %s382
      %p391 = scmp.eq.s32.totalorder %s30, 1
      %p392 = por %p390, %p391
      %p393 = scmp.ne.s32.totalorder %s382, %s383
      %p394 = scmp.eq.s32.totalorder %s30, 0
      %p395 = por %p393, %p394
      %p396 = scmp.ne.s32.totalorder %s382, %s383
      %p397 = scmp.eq.s32.totalorder %s31, 1
      %p398 = por %p396, %p397
      %p400 = scmp.ne.s32.totalorder %s383, %s399
      %p401 = scmp.eq.s32.totalorder %s31, 0
      %p402 = por %p400, %p401
      %s403 = ssub.s32 %s25, %s32
      %p404 = scmp.eq.s32.totalorder %s403, 0
      %s406 = sadd.s32 %s405, 1
      %s407 = scalar_select %p404, %s405, %s406
      %p410 = pneg %p404
      %p411 = scmp.eq.s32.totalorder %s25, 1
      %p412 = por %p410, %p411
      %p413 = scmp.ne.s32.totalorder %s405, %s408
      %p414 = scmp.eq.s32.totalorder %s25, 0
      %p415 = por %p413, %p414
      %p416 = scmp.ne.s32.totalorder %s405, %s408
      %p417 = scmp.eq.s32.totalorder %s30, 1
      %p418 = por %p416, %p417
      %p419 = scmp.ne.s32.totalorder %s408, %s409
      %p420 = scmp.eq.s32.totalorder %s30, 0
      %p421 = por %p419, %p420
      %p422 = scmp.ne.s32.totalorder %s408, %s409
      %p423 = scmp.eq.s32.totalorder %s31, 1
      %p424 = por %p422, %p423
      %p426 = scmp.ne.s32.totalorder %s409, %s425
      %p427 = scmp.eq.s32.totalorder %s31, 0
      %p428 = por %p426, %p427
      %s430 = sadd.s32 %s429, 1
      %p433 = scmp.eq.s32.totalorder %s25, 1
      %p434 = scmp.ne.s32.totalorder %s429, %s431
      %p435 = scmp.eq.s32.totalorder %s25, 0
      %p436 = por %p434, %p435
      %p437 = scmp.ne.s32.totalorder %s429, %s431
      %p438 = scmp.eq.s32.totalorder %s30, 1
      %p439 = por %p437, %p438
      %p440 = scmp.ne.s32.totalorder %s431, %s432
      %p441 = scmp.eq.s32.totalorder %s30, 0
      %p442 = por %p440, %p441
      %p443 = scmp.ne.s32.totalorder %s431, %s432
      %p444 = scmp.eq.s32.totalorder %s31, 1
      %p445 = por %p443, %p444
      %p447 = scmp.ne.s32.totalorder %s432, %s446
      %p448 = scmp.eq.s32.totalorder %s31, 0
      %p449 = por %p447, %p448
      %p450 = scmp.le.s32.totalorder 1, %s25
      %p451 = scmp.lt.s32.totalorder %s25, 3
      %p452 = pnand %p450, %p451
      %p453 = pneg %p452
      // Predicated region
      $region9: #{tpu_custom_call.1} parent=5 // pred_check
        _
      $region10: #{tpu_custom_call.1} parent=5 // pred_check_branch
        %455 = sbr.rel (%p452) target = $region12
      $region11: #{tpu_custom_call.1} parent=5 // pred_region
        %s456 = ssub.s32 %s25, 1
        // Predicated region
        $region13: #{tpu_custom_call.1} parent=11 // pred_check
          %p457 = pneg %p46
        $region14: #{tpu_custom_call.1} parent=11 // pred_check_branch
          %459 = sbr.rel (%p457) target = $region16
        $region15: #{tpu_custom_call.1} parent=11 // pred_region
          %s461 = ssub.s32 256, 256
          %462 = vsyncadd [#allocation6], %s461
          %s463 = sshll.u32 [#allocation5], 4
          %s464 = int_to_ptr.vmem [resolvable:$true] %s463
          %469 = dma.hbm_to_vmem [thread:$0]  %s0, 256, %s464, [#allocation6], 128, 128, 8
        $region16: #{tpu_custom_call.1} parent=11 // pred_fallthru
          _
        // Predicated region
        $region17: #{tpu_custom_call.1} parent=11 // pred_check
          %p470 = pneg %p67
        $region18: #{tpu_custom_call.1} parent=11 // pred_check_branch
          %472 = sbr.rel (%p470) target = $region20
        $region19: #{tpu_custom_call.1} parent=11 // pred_region
          _
        $region20: #{tpu_custom_call.1} parent=11 // pred_fallthru
          _
        // Predicated region
        $region21: #{tpu_custom_call.1} parent=11 // pred_check
          %p473 = pneg %p88
        $region22: #{tpu_custom_call.1} parent=11 // pred_check_branch
          %475 = sbr.rel (%p473) target = $region24
        $region23: #{tpu_custom_call.1} parent=11 // pred_region
          _
        $region24: #{tpu_custom_call.1} parent=11 // pred_fallthru
          _
        // Predicated region
        $region25: #{tpu_custom_call.1} parent=11 // pred_check
          %p476 = pneg %p109
        $region26: #{tpu_custom_call.1} parent=11 // pred_check_branch
          %478 = sbr.rel (%p476) target = $region28
        $region27: #{tpu_custom_call.1} parent=11 // pred_region
          %s480 = ssub.s32 16, 16
          %481 = vsyncadd [#allocation9], %s480
          %s483 = sshll.u32 [#allocation8], 4
          %s484 = int_to_ptr.vmem [resolvable:$true] %s483
          %486 = dma.hbm_to_vmem [thread:$0]  %s3, 16, %s484, [#allocation9]
        $region28: #{tpu_custom_call.1} parent=11 // pred_fallthru
          _
      $region12: #{tpu_custom_call.1} parent=5 // pred_fallthru
        _
      %p487 = scmp.lt.s32.totalorder %s25, 2
      // Predicated region
      $region29: #{tpu_custom_call.1} parent=5 // pred_check
        %p488 = pneg %p487
      $region30: #{tpu_custom_call.1} parent=5 // pred_check_branch
        %490 = sbr.rel (%p488) target = $region32
      $region31: #{tpu_custom_call.1} parent=5 // pred_region
        // Predicated region
        $region33: #{tpu_custom_call.1} parent=31 // pred_check
          %p491 = pneg %p129
        $region34: #{tpu_custom_call.1} parent=31 // pred_check_branch
          %493 = sbr.rel (%p491) target = $region36
        $region35: #{tpu_custom_call.1} parent=31 // pred_region
          %p494 = scmp.lt.s32.totalorder %s25, 1
          %s495 = scalar_select %p494, %s25, 1
          %s496 = smul.addr %s495, 4
          %s497 = smul.addr %s496, 4
          %s498 = scalar_lea.vmem %s4, %s497
        $region36: #{tpu_custom_call.1} parent=31 // pred_fallthru
          _
        // Predicated region
        $region37: #{tpu_custom_call.1} parent=31 // pred_check
          %p499 = pneg %p155
        $region38: #{tpu_custom_call.1} parent=31 // pred_check_branch
          %501 = sbr.rel (%p499) target = $region40
        $region39: #{tpu_custom_call.1} parent=31 // pred_region
          %p502 = scmp.lt.s32.totalorder %s25, 1
          %s503 = scalar_select %p502, %s25, 1
          %s504 = scalar_lea.vmem %s5, %s503
        $region40: #{tpu_custom_call.1} parent=31 // pred_fallthru
          _
        // Predicated region
        $region41: #{tpu_custom_call.1} parent=31 // pred_check
          %p505 = pneg %p181
        $region42: #{tpu_custom_call.1} parent=31 // pred_check_branch
          %507 = sbr.rel (%p505) target = $region44
        $region43: #{tpu_custom_call.1} parent=31 // pred_region
          %p508 = scmp.lt.s32.totalorder %s25, 1
          %s509 = scalar_select %p508, %s25, 1
          %s510 = smul.addr %s509, 4
          %s511 = smul.addr %s510, 4
          %s512 = scalar_lea.vmem %s6, %s511
        $region44: #{tpu_custom_call.1} parent=31 // pred_fallthru
          _
        // Predicated region
        $region45: #{tpu_custom_call.1} parent=31 // pred_check
          %p513 = pneg %p207
        $region46: #{tpu_custom_call.1} parent=31 // pred_check_branch
          %515 = sbr.rel (%p513) target = $region48
        $region47: #{tpu_custom_call.1} parent=31 // pred_region
          %p516 = scmp.lt.s32.totalorder %s25, 1
          %s517 = scalar_select %p516, %s25, 1
          %s518 = scalar_lea.vmem %s7, %s517
        $region48: #{tpu_custom_call.1} parent=31 // pred_fallthru
          _
        // Predicated region
        $region49: #{tpu_custom_call.1} parent=31 // pred_check
          %p519 = pneg %p233
        $region50: #{tpu_custom_call.1} parent=31 // pred_check_branch
          %521 = sbr.rel (%p519) target = $region52
        $region51: #{tpu_custom_call.1} parent=31 // pred_region
          %p522 = scmp.lt.s32.totalorder %s25, 1
          %s523 = scalar_select %p522, %s25, 1
          %s524 = scalar_lea.vmem %s8, %s523
        $region52: #{tpu_custom_call.1} parent=31 // pred_fallthru
          _
        // Predicated region
        $region53: #{tpu_custom_call.1} parent=31 // pred_check
          %p525 = pneg %p259
        $region54: #{tpu_custom_call.1} parent=31 // pred_check_branch
          %527 = sbr.rel (%p525) target = $region56
        $region55: #{tpu_custom_call.1} parent=31 // pred_region
          %p528 = scmp.lt.s32.totalorder %s25, 1
          %s529 = scalar_select %p528, %s25, 1
          %s530 = scalar_lea.vmem %s9, %s529
        $region56: #{tpu_custom_call.1} parent=31 // pred_fallthru
          _
        // Predicated region
        $region57: #{tpu_custom_call.1} parent=31 // pred_check
          %p531 = pneg %p285
        $region58: #{tpu_custom_call.1} parent=31 // pred_check_branch
          %533 = sbr.rel (%p531) target = $region60
        $region59: #{tpu_custom_call.1} parent=31 // pred_region
          %p534 = scmp.lt.s32.totalorder %s25, 1
          %s535 = scalar_select %p534, %s25, 1
          %s536 = smul.addr %s535, 4
          %s537 = smul.addr %s536, 4
          %s538 = scalar_lea.vmem %s10, %s537
        $region60: #{tpu_custom_call.1} parent=31 // pred_fallthru
          _
        // Predicated region
        $region61: #{tpu_custom_call.1} parent=31 // pred_check
          %p539 = pneg %p311
        $region62: #{tpu_custom_call.1} parent=31 // pred_check_branch
          %541 = sbr.rel (%p539) target = $region64
        $region63: #{tpu_custom_call.1} parent=31 // pred_region
          %p542 = scmp.lt.s32.totalorder %s25, 1
          %s543 = scalar_select %p542, %s25, 1
          %s544 = scalar_lea.vmem %s11, %s543
        $region64: #{tpu_custom_call.1} parent=31 // pred_fallthru
          _
        // Predicated region
        $region65: #{tpu_custom_call.1} parent=31 // pred_check
          %p545 = pneg %p337
        $region66: #{tpu_custom_call.1} parent=31 // pred_check_branch
          %547 = sbr.rel (%p545) target = $region68
        $region67: #{tpu_custom_call.1} parent=31 // pred_region
          %p548 = scmp.lt.s32.totalorder %s25, 1
          %s549 = scalar_select %p548, %s25, 1
          %s550 = smul.addr %s549, 8
          %s551 = smul.addr %s550, 4
          %s552 = scalar_lea.vmem %s12, %s551
        $region68: #{tpu_custom_call.1} parent=31 // pred_fallthru
          _
        // Predicated region
        $region69: #{tpu_custom_call.1} parent=31 // pred_check
          %p553 = pneg %p363
        $region70: #{tpu_custom_call.1} parent=31 // pred_check_branch
          %555 = sbr.rel (%p553) target = $region72
        $region71: #{tpu_custom_call.1} parent=31 // pred_region
          %p556 = scmp.lt.s32.totalorder %s25, 1
          %s557 = scalar_select %p556, %s25, 1
          %s558 = scalar_lea.vmem %s13, %s557
        $region72: #{tpu_custom_call.1} parent=31 // pred_fallthru
          _
        // Predicated region
        $region73: #{tpu_custom_call.1} parent=31 // pred_check
          %p559 = pneg %p389
        $region74: #{tpu_custom_call.1} parent=31 // pred_check_branch
          %561 = sbr.rel (%p559) target = $region76
        $region75: #{tpu_custom_call.1} parent=31 // pred_region
          %p562 = scmp.lt.s32.totalorder %s25, 1
          %s563 = scalar_select %p562, %s25, 1
          %s564 = scalar_lea.vmem %s14, %s563
        $region76: #{tpu_custom_call.1} parent=31 // pred_fallthru
          _
        // Predicated region
        $region77: #{tpu_custom_call.1} parent=31 // pred_check
          %p565 = pneg %p415
        $region78: #{tpu_custom_call.1} parent=31 // pred_check_branch
          %567 = sbr.rel (%p565) target = $region80
        $region79: #{tpu_custom_call.1} parent=31 // pred_region
          %p568 = scmp.lt.s32.totalorder %s25, 1
          %s569 = scalar_select %p568, %s25, 1
          %s570 = scalar_lea.vmem %s15, %s569
        $region80: #{tpu_custom_call.1} parent=31 // pred_fallthru
          _
      $region32: #{tpu_custom_call.1} parent=5 // pred_fallthru
        _
      %p571 = scmp.le.s32.totalorder 1, %s25
      %p572 = scmp.lt.s32.totalorder %s25, 3
      %p573 = pnand %p571, %p572
      %p574 = pneg %p573
      // Predicated region
      $region81: #{tpu_custom_call.1} parent=5 // pred_check
        _
      $region82: #{tpu_custom_call.1} parent=5 // pred_check_branch
        %576 = sbr.rel (%p573) target = $region84
      $region83: #{tpu_custom_call.1} parent=5 // pred_region
        %s577 = ssub.s32 %s25, 1
        // Predicated region
        $region85: #{tpu_custom_call.1} parent=83 // pred_check
          %p578 = pneg %p46
        $region86: #{tpu_custom_call.1} parent=83 // pred_check_branch
          %580 = sbr.rel (%p578) target = $region88
        $region87: #{tpu_custom_call.1} parent=83 // pred_region
          %581 = dma.done [#allocation6], 256
        $region88: #{tpu_custom_call.1} parent=83 // pred_fallthru
          _
        // Predicated region
        $region89: #{tpu_custom_call.1} parent=83 // pred_check
          %p582 = pneg %p109
        $region90: #{tpu_custom_call.1} parent=83 // pred_check_branch
          %584 = sbr.rel (%p582) target = $region92
        $region91: #{tpu_custom_call.1} parent=83 // pred_region
          %585 = dma.done [#allocation9], 16
        $region92: #{tpu_custom_call.1} parent=83 // pred_fallthru
          _
        %p586 = pneg %p46
        %p587 = pneg %p43
        %p588 = pneg %p67
        %p589 = pneg %p64
        %p590 = pneg %p88
        %p591 = pneg %p85
        %p592 = pneg %p109
        %p593 = pneg %p106
        %p594 = scmp.lt.s32.totalorder %s30, 1
        %s595 = scalar_select %p594, %s30, 1
        %s596 = smul.addr %s595, 4
        %s597 = smul.addr %s596, 4
        %s598 = scalar_lea.vmem %s4, %s597
        %p599 = pneg %p135
        %p600 = pneg %p132
        %p601 = scmp.lt.s32.totalorder %s30, 1
        %s602 = scalar_select %p601, %s30, 1
        %s603 = scalar_lea.vmem %s5, %s602
        %p604 = pneg %p161
        %p605 = pneg %p158
        %p606 = scmp.lt.s32.totalorder %s30, 1
        %s607 = scalar_select %p606, %s30, 1
        %s608 = smul.addr %s607, 4
        %s609 = smul.addr %s608, 4
        %s610 = scalar_lea.vmem %s6, %s609
        %p611 = pneg %p187
        %p612 = pneg %p184
        %p613 = scmp.lt.s32.totalorder %s30, 1
        %s614 = scalar_select %p613, %s30, 1
        %s615 = scalar_lea.vmem %s7, %s614
        %p616 = pneg %p213
        %p617 = pneg %p210
        %p618 = scmp.lt.s32.totalorder %s30, 1
        %s619 = scalar_select %p618, %s30, 1
        %s620 = scalar_lea.vmem %s8, %s619
        %p621 = pneg %p239
        %p622 = pneg %p236
        %p623 = scmp.lt.s32.totalorder %s30, 1
        %s624 = scalar_select %p623, %s30, 1
        %s625 = scalar_lea.vmem %s9, %s624
        %p626 = pneg %p265
        %p627 = pneg %p262
        %p628 = scmp.lt.s32.totalorder %s30, 1
        %s629 = scalar_select %p628, %s30, 1
        %s630 = smul.addr %s629, 4
        %s631 = smul.addr %s630, 4
        %s632 = scalar_lea.vmem %s10, %s631
        %p633 = pneg %p291
        %p634 = pneg %p288
        %p635 = scmp.lt.s32.totalorder %s30, 1
        %s636 = scalar_select %p635, %s30, 1
        %s637 = scalar_lea.vmem %s11, %s636
        %p638 = pneg %p317
        %p639 = pneg %p314
        %p640 = scmp.lt.s32.totalorder %s30, 1
        %s641 = scalar_select %p640, %s30, 1
        %s642 = smul.addr %s641, 8
        %s643 = smul.addr %s642, 4
        %s644 = scalar_lea.vmem %s12, %s643
        %p645 = pneg %p343
        %p646 = pneg %p340
        %p647 = scmp.lt.s32.totalorder %s30, 1
        %s648 = scalar_select %p647, %s30, 1
        %s649 = scalar_lea.vmem %s13, %s648
        %p650 = pneg %p369
        %p651 = pneg %p366
        %p652 = scmp.lt.s32.totalorder %s30, 1
        %s653 = scalar_select %p652, %s30, 1
        %s654 = scalar_lea.vmem %s14, %s653
        %p655 = pneg %p395
        %p656 = pneg %p392
        %p657 = scmp.lt.s32.totalorder %s30, 1
        %s658 = scalar_select %p657, %s30, 1
        %s659 = scalar_lea.vmem %s15, %s658
        %p660 = pneg %p421
        %p661 = pneg %p418
        %p662 = pneg %p442
        %p663 = pneg %p439
        %p664 = scmp.lt.s32.totalorder %s30, 1
        %s665 = scalar_select %p664, %s30, 1
        %s666 = smul.addr %s665, 4
        %s667 = smul.addr %s666, 4
        %s668 = scalar_lea.vmem %s4, %s667
        %p669 = scmp.lt.s32.totalorder %s30, 1
        %s670 = scalar_select %p669, %s30, 1
        %s671 = scalar_lea.vmem %s5, %s670
        %p672 = scmp.lt.s32.totalorder %s30, 1
        %s673 = scalar_select %p672, %s30, 1
        %s674 = smul.addr %s673, 4
        %s675 = smul.addr %s674, 4
        %s676 = scalar_lea.vmem %s6, %s675
        %p677 = scmp.lt.s32.totalorder %s30, 1
        %s678 = scalar_select %p677, %s30, 1
        %s679 = scalar_lea.vmem %s7, %s678
        %p680 = scmp.lt.s32.totalorder %s30, 1
        %s681 = scalar_select %p680, %s30, 1
        %s682 = scalar_lea.vmem %s8, %s681
        %p683 = scmp.lt.s32.totalorder %s30, 1
        %s684 = scalar_select %p683, %s30, 1
        %s685 = scalar_lea.vmem %s9, %s684
        %p686 = scmp.lt.s32.totalorder %s30, 1
        %s687 = scalar_select %p686, %s30, 1
        %s688 = smul.addr %s687, 4
        %s689 = smul.addr %s688, 4
        %s690 = scalar_lea.vmem %s10, %s689
        %p691 = scmp.lt.s32.totalorder %s30, 1
        %s692 = scalar_select %p691, %s30, 1
        %s693 = scalar_lea.vmem %s11, %s692
        %p694 = scmp.lt.s32.totalorder %s30, 1
        %s695 = scalar_select %p694, %s30, 1
        %s696 = smul.addr %s695, 8
        %s697 = smul.addr %s696, 4
        %s698 = scalar_lea.vmem %s12, %s697
        %p699 = scmp.lt.s32.totalorder %s30, 1
        %s700 = scalar_select %p699, %s30, 1
        %s701 = scalar_lea.vmem %s13, %s700
        %p702 = scmp.lt.s32.totalorder %s30, 1
        %s703 = scalar_select %p702, %s30, 1
        %s704 = scalar_lea.vmem %s14, %s703
        %p705 = scmp.lt.s32.totalorder %s30, 1
        %s706 = scalar_select %p705, %s30, 1
        %s707 = scalar_lea.vmem %s15, %s706
        %p709 = scmp.eq.s32.totalorder %s30, 0
        // Predicated region
        $region93: #{tpu_custom_call.1} parent=83 // pred_check
          %p710 = pneg %p709
        $region94: #{tpu_custom_call.1} parent=83 // pred_check_branch
          %712 = sbr.rel (%p710) target = $region96
        $region95: #{tpu_custom_call.1} parent=83 // pred_region
          %v713 = vld [vmem:[#allocation5] sm:$0xff]
          %v714 = vld [vmem:[#allocation5 + $0x8] sm:$0xff]
          %v715 = vld [vmem:[%s2] sm:$0x1]
          %v716 = vld [vmem:[#allocation8] sm:$0x1]
          %vm717 = vcmask 261120
          %v718 = vsel %vm717, %v713, 0.0
          %719 = vadd.xlane.f32.xlu0 %v718
          %v720 = vpop.xlane.xlu0 %719
          %v721 = vsel %vm717, %v714, 0.0
          %722 = vadd.xlane.f32.xlu0 %v721
          %v723 = vpop.xlane.xlu0 %722
          %v724 = vrcp.pop 32.0
          %v725 = vmul.f32 %v720, %v724
          %v726 = vmul.f32 %v723, %v724
          %v727 = vsub.f32 %v713, %v725
          %v728 = vsub.f32 %v714, %v726
          %v729 = vmul.f32 %v727, %v727
          %v730 = vmul.f32 %v728, %v728
          %v731 = vsel %vm717, %v729, 0.0
          %732 = vadd.xlane.f32.xlu0 %v731
          %v733 = vpop.xlane.xlu0 %732
          %v734 = vsel %vm717, %v730, 0.0
          %735 = vadd.xlane.f32.xlu0 %v734
          %v736 = vpop.xlane.xlu0 %735
          %v737 = vmul.f32 %v733, %v724
          %v738 = vmul.f32 %v736, %v724
          %v739 = vadd.f32 %v737, 1e-12
          %v740 = vadd.f32 %v738, 1e-12
          %v741 = vrsqrt.pop %v739
          %v742 = vrsqrt.pop %v740
          %v743 = vmul.f32 %v727, %v741
          %v744 = vmul.f32 %v728, %v742
          %v746 = vlaneseq
          %v747 = vshrl.u32 %v746, 7
          %v748 = vsub.s32 0, %v747
          %v749 = vrot.slane %v715, %v748
          %v751 = vmul.f32 %v743, %v749
          %v752 = vmul.f32 %v744, %v749
          %v754 = vlaneseq
          %v755 = vshrl.u32 %v754, 7
          %v756 = vsub.s32 0, %v755
          %v757 = vrot.slane %v716, %v756
          %v759 = vadd.f32 %v751, %v757
          %v760 = vadd.f32 %v752, %v757
          %761 = vst.msk [vmem:[#allocation2] sm:$0xff] %vm717, %v759
          %762 = vst.msk [vmem:[#allocation2 + $0x8] sm:$0xff] %vm717, %v760
        $region96: #{tpu_custom_call.1} parent=83 // pred_fallthru
          _
        %v763 = vld [vmem:[#allocation2] sm:$0xff]
        %v764 = vld [vmem:[#allocation2 + $0x8] sm:$0xff]
        %v765 = vpack.c.bf16 %v764, %v763
        %v766 = vld [vmem:[%s668] sm:$0xf]
        %v767 = vld [vmem:[%s668 + $0x4] sm:$0xf]
        %v768 = vld [vmem:[%s668 + $0x8] sm:$0xf]
        %v769 = vld [vmem:[%s668 + $0xc] sm:$0xf]
        %v770 = vld [vmem:[%s671] sm:$0x1]
        %v772 = vlaneseq
        %v773 = vshrl.u32 %v772, 7
        %v774 = vsub.s32 0, %v773
        %v775 = vrot.slane %v770, %v774
        %v781 = vunpack.c.l.b16 %v766
        %v782 = vunpack.c.l.b16 %v767
        %v783 = vunpack.c.l.b16 %v768
        %v784 = vunpack.c.l.b16 %v769
        %v785 = vpack.c.b16 %v782, %v781
        %v786 = vpack.c.b16 %v784, %v783
        %vm789 = vcmask 261120
        %v791 = vsel %vm789, %v765, 0
        %793 = vmatprep.subr.bf16.mxu0 0
        %794 = vmatpush1.bf16.msra.mxu0 %v785
        %795 = vmatprep.subr.bf16.mxu0 0
        %796 = vmatpush1.bf16.msra.mxu0 %v786
        %797 = vmatprep.subr.bf16.mxu0 0
        %798 = vmatpush1.bf16.msra.mxu0 0
        %799 = vmatprep.subr.bf16.mxu0 0
        %800 = vmatpush1.bf16.msra.mxu0 0
        %801 = vmatprep.subr.bf16.mxu0 0
        %802 = vmatpush1.bf16.msra.mxu0 0
        %803 = vmatprep.subr.bf16.mxu0 0
        %804 = vmatpush1.bf16.msra.mxu0 0
        %805 = vmatprep.subr.bf16.mxu0 0
        %806 = vmatpush1.bf16.msra.mxu0 0
        %807 = vmatprep.subr.bf16.mxu0 0
        %808 = vmatpush1.bf16.msra.mxu0 0
        %809 = vmatprep.subr.bf16.mxu0 0
        %810 = vmatpush1.bf16.msra.mxu0 0
        %811 = vmatprep.subr.bf16.mxu0 0
        %812 = vmatpush1.bf16.msra.mxu0 0
        %813 = vmatprep.subr.bf16.mxu0 0
        %814 = vmatpush1.bf16.msra.mxu0 0
        %815 = vmatprep.subr.bf16.mxu0 0
        %816 = vmatpush1.bf16.msra.mxu0 0
        %817 = vmatprep.subr.bf16.mxu0 0
        %818 = vmatpush1.bf16.msra.mxu0 0
        %819 = vmatprep.subr.bf16.mxu0 0
        %820 = vmatpush1.bf16.msra.mxu0 0
        %821 = vmatprep.subr.bf16.mxu0 0
        %822 = vmatpush1.bf16.msra.mxu0 0
        %823 = vmatprep.subr.bf16.mxu0 0
        %824 = vmatpush1.bf16.msra.mxu0 0
        %825 = vmatprep.mubr.bf16.mxu0 0
        %826 = vmatmul.mubr.bf16.gmra.mrb[0].mxu0 %v791
        %v827 = vpop.f32.mrb[0].mxu0
        %v828 = vadd.f32 %v775, %v827
        %v829 = vpop.f32.mrb[0].mxu0
        %v830 = vpop.f32.mrb[0].mxu0
        %v831 = vadd.f32 %v775, %v830
        %v832 = vpop.f32.mrb[0].mxu0
        %833 = vdwg.mxu0
        %vm834 = vcmask 785408
        %835 = vst.msk [vmem:[#allocation3] sm:$0xff] %vm834, %v828
        %836 = vst.msk [vmem:[#allocation3 + $0x8] sm:$0xff] %vm834, %v831
        %v837 = vld [vmem:[%s1] sm:$0x3]
        %v838 = vld [vmem:[#allocation3] sm:$0xff]
        %v839 = vpack.c.bf16 %v838, %v838
        %841 = vrot.lane.b32.xlu0 %v839, 96
        %v842 = vpop.permute.xlu0 %841
        %vm843 = vcmask 130048
        %v845 = vsel %vm843, %v839, 0
        %v848 = vsel %vm843, %v842, 0
        %850 = vmatprep.subr.bf16.mxu0 0
        %851 = vmatpush1.bf16.xpose.msra.mxu0 %v848
        %852 = vmatprep.subr.bf16.mxu0 0
        %853 = vmatpush1.bf16.xpose.msra.mxu0 0
        %854 = vmatprep.subr.bf16.mxu0 0
        %855 = vmatpush1.bf16.xpose.msra.mxu0 0
        %856 = vmatprep.subr.bf16.mxu0 0
        %857 = vmatpush1.bf16.xpose.msra.mxu0 0
        %858 = vmatprep.subr.bf16.mxu0 0
        %859 = vmatpush1.bf16.xpose.msra.mxu0 0
        %860 = vmatprep.subr.bf16.mxu0 0
        %861 = vmatpush1.bf16.xpose.msra.mxu0 0
        %862 = vmatprep.subr.bf16.mxu0 0
        %863 = vmatpush1.bf16.xpose.msra.mxu0 0
        %864 = vmatprep.subr.bf16.mxu0 0
        %865 = vmatpush1.bf16.xpose.msra.mxu0 0
        %866 = vmatprep.subr.bf16.mxu0 0
        %867 = vmatpush1.bf16.xpose.msra.mxu0 0
        %868 = vmatprep.subr.bf16.mxu0 0
        %869 = vmatpush1.bf16.xpose.msra.mxu0 0
        %870 = vmatprep.subr.bf16.mxu0 0
        %871 = vmatpush1.bf16.xpose.msra.mxu0 0
        %872 = vmatprep.subr.bf16.mxu0 0
        %873 = vmatpush1.bf16.xpose.msra.mxu0 0
        %874 = vmatprep.subr.bf16.mxu0 0
        %875 = vmatpush1.bf16.xpose.msra.mxu0 0
        %876 = vmatprep.subr.bf16.mxu0 0
        %877 = vmatpush1.bf16.xpose.msra.mxu0 0
        %878 = vmatprep.subr.bf16.mxu0 0
        %879 = vmatpush1.bf16.xpose.msra.mxu0 0
        %880 = vmatprep.subr.bf16.mxu0 0
        %881 = vmatpush1.bf16.xpose.msra.mxu0 0
        %882 = vmatprep.mubr.bf16.mxu0 0
        %883 = vmatmul.mubr.bf16.gmra.mrb[0].mxu0 %v845
        %v884 = vpop.f32.mrb[0].mxu0
        %v885 = vadd.f32 0.0, %v884
        %v886 = vpop.f32.mrb[0].mxu0
        %v887 = vpop.f32.mrb[0].mxu0
        %v888 = vpop.f32.mrb[0].mxu0
        %889 = vdwg.mxu0
        %v890 = vmul.f32 %v885, 0.25
        %v891 = vlaneseq
        %v892 = vshrl.u32 %v891, 7
        %v893 = vsub.s32 0, %v892
        %v894 = vrot.slane %v837, %v893
        %v895 = vadd.f32 %v890, %v894
        %vm896 = vcmask 64512
        %v897 = vsel %vm896, %v895, -inf
        %898 = vmax.xlane.f32.xlu0 %v897
        %v899 = vpop.xlane.xlu0 %898
        %v900 = vsub.f32 %v895, %v899
        %v901 = vmul.f32 %v900, 1.442695
        %v902 = vpow.pop %v901
        %v903 = vsel %vm896, %v902, 0.0
        %904 = vadd.xlane.f32.xlu0 %v903
        %v905 = vpop.xlane.xlu0 %904
        %v906 = vrcp.pop %v905
        %v907 = vmul.f32 %v902, %v906
        %v908 = vpack.c.bf16 %v907, %v907
        %909 = vrot.lane.b32.xlu0 %v839, 64
        %v910 = vpop.permute.xlu0 %909
        %v912 = vsel %vm896, %v908, 0
        %vm914 = vcmask 1043456
        %v916 = vsel %vm914, %v910, 0
        %918 = vmatprep.subr.bf16.mxu0 0
        %919 = vmatpush1.bf16.msra.mxu0 %v916
        %920 = vmatprep.subr.bf16.mxu0 0
        %921 = vmatpush1.bf16.msra.mxu0 0
        %922 = vmatprep.subr.bf16.mxu0 0
        %923 = vmatpush1.bf16.msra.mxu0 0
        %924 = vmatprep.subr.bf16.mxu0 0
        %925 = vmatpush1.bf16.msra.mxu0 0
        %926 = vmatprep.subr.bf16.mxu0 0
        %927 = vmatpush1.bf16.msra.mxu0 0
        %928 = vmatprep.subr.bf16.mxu0 0
        %929 = vmatpush1.bf16.msra.mxu0 0
        %930 = vmatprep.subr.bf16.mxu0 0
        %931 = vmatpush1.bf16.msra.mxu0 0
        %932 = vmatprep.subr.bf16.mxu0 0
        %933 = vmatpush1.bf16.msra.mxu0 0
        %934 = vmatprep.subr.bf16.mxu0 0
        %935 = vmatpush1.bf16.msra.mxu0 0
        %936 = vmatprep.subr.bf16.mxu0 0
        %937 = vmatpush1.bf16.msra.mxu0 0
        %938 = vmatprep.subr.bf16.mxu0 0
        %939 = vmatpush1.bf16.msra.mxu0 0
        %940 = vmatprep.subr.bf16.mxu0 0
        %941 = vmatpush1.bf16.msra.mxu0 0
        %942 = vmatprep.subr.bf16.mxu0 0
        %943 = vmatpush1.bf16.msra.mxu0 0
        %944 = vmatprep.subr.bf16.mxu0 0
        %945 = vmatpush1.bf16.msra.mxu0 0
        %946 = vmatprep.subr.bf16.mxu0 0
        %947 = vmatpush1.bf16.msra.mxu0 0
        %948 = vmatprep.subr.bf16.mxu0 0
        %949 = vmatpush1.bf16.msra.mxu0 0
        %950 = vmatprep.mubr.bf16.mxu0 0
        %951 = vmatmul.mubr.bf16.gmra.mrb[0].mxu0 %v912
        %v952 = vpop.f32.mrb[0].mxu0
        %v953 = vadd.f32 0.0, %v952
        %v954 = vpop.f32.mrb[0].mxu0
        %v955 = vpop.f32.mrb[0].mxu0
        %v956 = vpop.f32.mrb[0].mxu0
        %957 = vdwg.mxu0
        %958 = vst.msk [vmem:[#allocation4] sm:$0xff] %vm843, %v953
        %v959 = vld [vmem:[#allocation3] sm:$0xff]
        %v960 = vpack.c.bf16 %v959, %v959
        %962 = vrot.lane.b32.xlu0 %v960, 112
        %v963 = vpop.permute.xlu0 %962
        %964 = vrot.lane.b32.xlu0 %v960, 80
        %v965 = vpop.permute.xlu0 %964
        %v967 = vsel %vm843, %v963, 0
        %v970 = vsel %vm843, %v965, 0
        %972 = vmatprep.subr.bf16.mxu0 0
        %973 = vmatpush1.bf16.xpose.msra.mxu0 %v970
        %974 = vmatprep.subr.bf16.mxu0 0
        %975 = vmatpush1.bf16.xpose.msra.mxu0 0
        %976 = vmatprep.subr.bf16.mxu0 0
        %977 = vmatpush1.bf16.xpose.msra.mxu0 0
        %978 = vmatprep.subr.bf16.mxu0 0
        %979 = vmatpush1.bf16.xpose.msra.mxu0 0
        %980 = vmatprep.subr.bf16.mxu0 0
        %981 = vmatpush1.bf16.xpose.msra.mxu0 0
        %982 = vmatprep.subr.bf16.mxu0 0
        %983 = vmatpush1.bf16.xpose.msra.mxu0 0
        %984 = vmatprep.subr.bf16.mxu0 0
        %985 = vmatpush1.bf16.xpose.msra.mxu0 0
        %986 = vmatprep.subr.bf16.mxu0 0
        %987 = vmatpush1.bf16.xpose.msra.mxu0 0
        %988 = vmatprep.subr.bf16.mxu0 0
        %989 = vmatpush1.bf16.xpose.msra.mxu0 0
        %990 = vmatprep.subr.bf16.mxu0 0
        %991 = vmatpush1.bf16.xpose.msra.mxu0 0
        %992 = vmatprep.subr.bf16.mxu0 0
        %993 = vmatpush1.bf16.xpose.msra.mxu0 0
        %994 = vmatprep.subr.bf16.mxu0 0
        %995 = vmatpush1.bf16.xpose.msra.mxu0 0
        %996 = vmatprep.subr.bf16.mxu0 0
        %997 = vmatpush1.bf16.xpose.msra.mxu0 0
        %998 = vmatprep.subr.bf16.mxu0 0
        %999 = vmatpush1.bf16.xpose.msra.mxu0 0
        %1000 = vmatprep.subr.bf16.mxu0 0
        %1001 = vmatpush1.bf16.xpose.msra.mxu0 0
        %1002 = vmatprep.subr.bf16.mxu0 0
        %1003 = vmatpush1.bf16.xpose.msra.mxu0 0
        %1004 = vmatprep.mubr.bf16.mxu0 0
        %1005 = vmatmul.mubr.bf16.gmra.mrb[0].mxu0 %v967
        %v1006 = vpop.f32.mrb[0].mxu0
        %v1007 = vadd.f32 0.0, %v1006
        %v1008 = vpop.f32.mrb[0].mxu0
        %v1009 = vpop.f32.mrb[0].mxu0
        %v1010 = vpop.f32.mrb[0].mxu0
        %1011 = vdwg.mxu0
        %v1012 = vmul.f32 %v1007, 0.25
        %v1013 = vadd.f32 %v1012, %v894
        %v1014 = vsel %vm896, %v1013, -inf
        %1015 = vmax.xlane.f32.xlu0 %v1014
        %v1016 = vpop.xlane.xlu0 %1015
        %v1017 = vsub.f32 %v1013, %v1016
        %v1018 = vmul.f32 %v1017, 1.442695
        %v1019 = vpow.pop %v1018
        %v1020 = vsel %vm896, %v1019, 0.0
        %1021 = vadd.xlane.f32.xlu0 %v1020
        %v1022 = vpop.xlane.xlu0 %1021
        %v1023 = vrcp.pop %v1022
        %v1024 = vmul.f32 %v1019, %v1023
        %v1025 = vpack.c.bf16 %v1024, %v1024
        %1026 = vrot.lane.b32.xlu0 %v960, 48
        %v1027 = vpop.permute.xlu0 %1026
        %v1029 = vsel %vm896, %v1025, 0
        %v1032 = vsel %vm914, %v1027, 0
        %1034 = vmatprep.subr.bf16.mxu0 0
        %1035 = vmatpush1.bf16.msra.mxu0 %v1032
        %1036 = vmatprep.subr.bf16.mxu0 0
        %1037 = vmatpush1.bf16.msra.mxu0 0
        %1038 = vmatprep.subr.bf16.mxu0 0
        %1039 = vmatpush1.bf16.msra.mxu0 0
        %1040 = vmatprep.subr.bf16.mxu0 0
        %1041 = vmatpush1.bf16.msra.mxu0 0
        %1042 = vmatprep.subr.bf16.mxu0 0
        %1043 = vmatpush1.bf16.msra.mxu0 0
        %1044 = vmatprep.subr.bf16.mxu0 0
        %1045 = vmatpush1.bf16.msra.mxu0 0
        %1046 = vmatprep.subr.bf16.mxu0 0
        %1047 = vmatpush1.bf16.msra.mxu0 0
        %1048 = vmatprep.subr.bf16.mxu0 0
        %1049 = vmatpush1.bf16.msra.mxu0 0
        %1050 = vmatprep.subr.bf16.mxu0 0
        %1051 = vmatpush1.bf16.msra.mxu0 0
        %1052 = vmatprep.subr.bf16.mxu0 0
        %1053 = vmatpush1.bf16.msra.mxu0 0
        %1054 = vmatprep.subr.bf16.mxu0 0
        %1055 = vmatpush1.bf16.msra.mxu0 0
        %1056 = vmatprep.subr.bf16.mxu0 0
        %1057 = vmatpush1.bf16.msra.mxu0 0
        %1058 = vmatprep.subr.bf16.mxu0 0
        %1059 = vmatpush1.bf16.msra.mxu0 0
        %1060 = vmatprep.subr.bf16.mxu0 0
        %1061 = vmatpush1.bf16.msra.mxu0 0
        %1062 = vmatprep.subr.bf16.mxu0 0
        %1063 = vmatpush1.bf16.msra.mxu0 0
        %1064 = vmatprep.subr.bf16.mxu0 0
        %1065 = vmatpush1.bf16.msra.mxu0 0
        %1066 = vmatprep.mubr.bf16.mxu0 0
        %1067 = vmatmul.mubr.bf16.gmra.mrb[0].mxu0 %v1029
        %v1068 = vpop.f32.mrb[0].mxu0
        %v1069 = vadd.f32 0.0, %v1068
        %v1070 = vpop.f32.mrb[0].mxu0
        %v1071 = vpop.f32.mrb[0].mxu0
        %v1072 = vpop.f32.mrb[0].mxu0
        %1073 = vdwg.mxu0
        %1075 = vrot.lane.b32.xlu0 %v1069, 16
        %v1076 = vpop.permute.xlu0 %1075
        %vm1078 = vcmask 261248
        %1079 = vst.msk [vmem:[#allocation4] sm:$0xff] %vm1078, %v1076
        %v1080 = vld [vmem:[#allocation3 + $0x8] sm:$0xff]
        %v1081 = vpack.c.bf16 %v1080, %v1080
        %1083 = vrot.lane.b32.xlu0 %v1081, 96
        %v1084 = vpop.permute.xlu0 %1083
        %v1086 = vsel %vm843, %v1081, 0
        %v1089 = vsel %vm843, %v1084, 0
        %1091 = vmatprep.subr.bf16.mxu0 0
        %1092 = vmatpush1.bf16.xpose.msra.mxu0 %v1089
        %1093 = vmatprep.subr.bf16.mxu0 0
        %1094 = vmatpush1.bf16.xpose.msra.mxu0 0
        %1095 = vmatprep.subr.bf16.mxu0 0
        %1096 = vmatpush1.bf16.xpose.msra.mxu0 0
        %1097 = vmatprep.subr.bf16.mxu0 0
        %1098 = vmatpush1.bf16.xpose.msra.mxu0 0
        %1099 = vmatprep.subr.bf16.mxu0 0
        %1100 = vmatpush1.bf16.xpose.msra.mxu0 0
        %1101 = vmatprep.subr.bf16.mxu0 0
        %1102 = vmatpush1.bf16.xpose.msra.mxu0 0
        %1103 = vmatprep.subr.bf16.mxu0 0
        %1104 = vmatpush1.bf16.xpose.msra.mxu0 0
        %1105 = vmatprep.subr.bf16.mxu0 0
        %1106 = vmatpush1.bf16.xpose.msra.mxu0 0
        %1107 = vmatprep.subr.bf16.mxu0 0
        %1108 = vmatpush1.bf16.xpose.msra.mxu0 0
        %1109 = vmatprep.subr.bf16.mxu0 0
        %1110 = vmatpush1.bf16.xpose.msra.mxu0 0
        %1111 = vmatprep.subr.bf16.mxu0 0
        %1112 = vmatpush1.bf16.xpose.msra.mxu0 0
        %1113 = vmatprep.subr.bf16.mxu0 0
        %1114 = vmatpush1.bf16.xpose.msra.mxu0 0
        %1115 = vmatprep.subr.bf16.mxu0 0
        %1116 = vmatpush1.bf16.xpose.msra.mxu0 0
        %1117 = vmatprep.subr.bf16.mxu0 0
        %1118 = vmatpush1.bf16.xpose.msra.mxu0 0
        %1119 = vmatprep.subr.bf16.mxu0 0
        %1120 = vmatpush1.bf16.xpose.msra.mxu0 0
        %1121 = vmatprep.subr.bf16.mxu0 0
        %1122 = vmatpush1.bf16.xpose.msra.mxu0 0
        %1123 = vmatprep.mubr.bf16.mxu0 0
        %1124 = vmatmul.mubr.bf16.gmra.mrb[0].mxu0 %v1086
        %v1125 = vpop.f32.mrb[0].mxu0
        %v1126 = vadd.f32 0.0, %v1125
        %v1127 = vpop.f32.mrb[0].mxu0
        %v1128 = vpop.f32.mrb[0].mxu0
        %v1129 = vpop.f32.mrb[0].mxu0
        %1130 = vdwg.mxu0
        %v1131 = vmul.f32 %v1126, 0.25
        %v1132 = vlaneseq
        %v1133 = vshrl.u32 %v1132, 7
        %v1134 = vsub.s32 1, %v1133
        %v1135 = vrot.slane %v837, %v1134
        %v1136 = vadd.f32 %v1131, %v1135
        %v1137 = vsel %vm896, %v1136, -inf
        %1138 = vmax.xlane.f32.xlu0 %v1137
        %v1139 = vpop.xlane.xlu0 %1138
        %v1140 = vsub.f32 %v1136, %v1139
        %v1141 = vmul.f32 %v1140, 1.442695
        %v1142 = vpow.pop %v1141
        %v1143 = vsel %vm896, %v1142, 0.0
        %1144 = vadd.xlane.f32.xlu0 %v1143
        %v1145 = vpop.xlane.xlu0 %1144
        %v1146 = vrcp.pop %v1145
        %v1147 = vmul.f32 %v1142, %v1146
        %v1148 = vpack.c.bf16 %v1147, %v1147
        %1149 = vrot.lane.b32.xlu0 %v1081, 64
        %v1150 = vpop.permute.xlu0 %1149
        %v1152 = vsel %vm896, %v1148, 0
        %v1155 = vsel %vm914, %v1150, 0
        %1157 = vmatprep.subr.bf16.mxu0 0
        %1158 = vmatpush1.bf16.msra.mxu0 %v1155
        %1159 = vmatprep.subr.bf16.mxu0 0
        %1160 = vmatpush1.bf16.msra.mxu0 0
        %1161 = vmatprep.subr.bf16.mxu0 0
        %1162 = vmatpush1.bf16.msra.mxu0 0
        %1163 = vmatprep.subr.bf16.mxu0 0
        %1164 = vmatpush1.bf16.msra.mxu0 0
        %1165 = vmatprep.subr.bf16.mxu0 0
        %1166 = vmatpush1.bf16.msra.mxu0 0
        %1167 = vmatprep.subr.bf16.mxu0 0
        %1168 = vmatpush1.bf16.msra.mxu0 0
        %1169 = vmatprep.subr.bf16.mxu0 0
        %1170 = vmatpush1.bf16.msra.mxu0 0
        %1171 = vmatprep.subr.bf16.mxu0 0
        %1172 = vmatpush1.bf16.msra.mxu0 0
        %1173 = vmatprep.subr.bf16.mxu0 0
        %1174 = vmatpush1.bf16.msra.mxu0 0
        %1175 = vmatprep.subr.bf16.mxu0 0
        %1176 = vmatpush1.bf16.msra.mxu0 0
        %1177 = vmatprep.subr.bf16.mxu0 0
        %1178 = vmatpush1.bf16.msra.mxu0 0
        %1179 = vmatprep.subr.bf16.mxu0 0
        %1180 = vmatpush1.bf16.msra.mxu0 0
        %1181 = vmatprep.subr.bf16.mxu0 0
        %1182 = vmatpush1.bf16.msra.mxu0 0
        %1183 = vmatprep.subr.bf16.mxu0 0
        %1184 = vmatpush1.bf16.msra.mxu0 0
        %1185 = vmatprep.subr.bf16.mxu0 0
        %1186 = vmatpush1.bf16.msra.mxu0 0
        %1187 = vmatprep.subr.bf16.mxu0 0
        %1188 = vmatpush1.bf16.msra.mxu0 0
        %1189 = vmatprep.mubr.bf16.mxu0 0
        %1190 = vmatmul.mubr.bf16.gmra.mrb[0].mxu0 %v1152
        %v1191 = vpop.f32.mrb[0].mxu0
        %v1192 = vadd.f32 0.0, %v1191
        %v1193 = vpop.f32.mrb[0].mxu0
        %v1194 = vpop.f32.mrb[0].mxu0
        %v1195 = vpop.f32.mrb[0].mxu0
        %1196 = vdwg.mxu0
        %1197 = vst.msk [vmem:[#allocation4 + $0x8] sm:$0xff] %vm843, %v1192
        %v1198 = vld [vmem:[#allocation3 + $0x8] sm:$0xff]
        %v1199 = vpack.c.bf16 %v1198, %v1198
        %1201 = vrot.lane.b32.xlu0 %v1199, 112
        %v1202 = vpop.permute.xlu0 %1201
        %1203 = vrot.lane.b32.xlu0 %v1199, 80
        %v1204 = vpop.permute.xlu0 %1203
        %v1206 = vsel %vm843, %v1202, 0
        %v1209 = vsel %vm843, %v1204, 0
        %1211 = vmatprep.subr.bf16.mxu0 0
        %1212 = vmatpush1.bf16.xpose.msra.mxu0 %v1209
        %1213 = vmatprep.subr.bf16.mxu0 0
        %1214 = vmatpush1.bf16.xpose.msra.mxu0 0
        %1215 = vmatprep.subr.bf16.mxu0 0
        %1216 = vmatpush1.bf16.xpose.msra.mxu0 0
        %1217 = vmatprep.subr.bf16.mxu0 0
        %1218 = vmatpush1.bf16.xpose.msra.mxu0 0
        %1219 = vmatprep.subr.bf16.mxu0 0
        %1220 = vmatpush1.bf16.xpose.msra.mxu0 0
        %1221 = vmatprep.subr.bf16.mxu0 0
        %1222 = vmatpush1.bf16.xpose.msra.mxu0 0
        %1223 = vmatprep.subr.bf16.mxu0 0
        %1224 = vmatpush1.bf16.xpose.msra.mxu0 0
        %1225 = vmatprep.subr.bf16.mxu0 0
        %1226 = vmatpush1.bf16.xpose.msra.mxu0 0
        %1227 = vmatprep.subr.bf16.mxu0 0
        %1228 = vmatpush1.bf16.xpose.msra.mxu0 0
        %1229 = vmatprep.subr.bf16.mxu0 0
        %1230 = vmatpush1.bf16.xpose.msra.mxu0 0
        %1231 = vmatprep.subr.bf16.mxu0 0
        %1232 = vmatpush1.bf16.xpose.msra.mxu0 0
        %1233 = vmatprep.subr.bf16.mxu0 0
        %1234 = vmatpush1.bf16.xpose.msra.mxu0 0
        %1235 = vmatprep.subr.bf16.mxu0 0
        %1236 = vmatpush1.bf16.xpose.msra.mxu0 0
        %1237 = vmatprep.subr.bf16.mxu0 0
        %1238 = vmatpush1.bf16.xpose.msra.mxu0 0
        %1239 = vmatprep.subr.bf16.mxu0 0
        %1240 = vmatpush1.bf16.xpose.msra.mxu0 0
        %1241 = vmatprep.subr.bf16.mxu0 0
        %1242 = vmatpush1.bf16.xpose.msra.mxu0 0
        %1243 = vmatprep.mubr.bf16.mxu0 0
        %1244 = vmatmul.mubr.bf16.gmra.mrb[0].mxu0 %v1206
        %v1245 = vpop.f32.mrb[0].mxu0
        %v1246 = vadd.f32 0.0, %v1245
        %v1247 = vpop.f32.mrb[0].mxu0
        %v1248 = vpop.f32.mrb[0].mxu0
        %v1249 = vpop.f32.mrb[0].mxu0
        %1250 = vdwg.mxu0
        %v1251 = vmul.f32 %v1246, 0.25
        %v1252 = vadd.f32 %v1251, %v1135
        %v1253 = vsel %vm896, %v1252, -inf
        %1254 = vmax.xlane.f32.xlu0 %v1253
        %v1255 = vpop.xlane.xlu0 %1254
        %v1256 = vsub.f32 %v1252, %v1255
        %v1257 = vmul.f32 %v1256, 1.442695
        %v1258 = vpow.pop %v1257
        %v1259 = vsel %vm896, %v1258, 0.0
        %1260 = vadd.xlane.f32.xlu0 %v1259
        %v1261 = vpop.xlane.xlu0 %1260
        %v1262 = vrcp.pop %v1261
        %v1263 = vmul.f32 %v1258, %v1262
        %v1264 = vpack.c.bf16 %v1263, %v1263
        %1265 = vrot.lane.b32.xlu0 %v1199, 48
        %v1266 = vpop.permute.xlu0 %1265
        %v1268 = vsel %vm896, %v1264, 0
        %v1271 = vsel %vm914, %v1266, 0
        %1273 = vmatprep.subr.bf16.mxu0 0
        %1274 = vmatpush1.bf16.msra.mxu0 %v1271
        %1275 = vmatprep.subr.bf16.mxu0 0
        %1276 = vmatpush1.bf16.msra.mxu0 0
        %1277 = vmatprep.subr.bf16.mxu0 0
        %1278 = vmatpush1.bf16.msra.mxu0 0
        %1279 = vmatprep.subr.bf16.mxu0 0
        %1280 = vmatpush1.bf16.msra.mxu0 0
        %1281 = vmatprep.subr.bf16.mxu0 0
        %1282 = vmatpush1.bf16.msra.mxu0 0
        %1283 = vmatprep.subr.bf16.mxu0 0
        %1284 = vmatpush1.bf16.msra.mxu0 0
        %1285 = vmatprep.subr.bf16.mxu0 0
        %1286 = vmatpush1.bf16.msra.mxu0 0
        %1287 = vmatprep.subr.bf16.mxu0 0
        %1288 = vmatpush1.bf16.msra.mxu0 0
        %1289 = vmatprep.subr.bf16.mxu0 0
        %1290 = vmatpush1.bf16.msra.mxu0 0
        %1291 = vmatprep.subr.bf16.mxu0 0
        %1292 = vmatpush1.bf16.msra.mxu0 0
        %1293 = vmatprep.subr.bf16.mxu0 0
        %1294 = vmatpush1.bf16.msra.mxu0 0
        %1295 = vmatprep.subr.bf16.mxu0 0
        %1296 = vmatpush1.bf16.msra.mxu0 0
        %1297 = vmatprep.subr.bf16.mxu0 0
        %1298 = vmatpush1.bf16.msra.mxu0 0
        %1299 = vmatprep.subr.bf16.mxu0 0
        %1300 = vmatpush1.bf16.msra.mxu0 0
        %1301 = vmatprep.subr.bf16.mxu0 0
        %1302 = vmatpush1.bf16.msra.mxu0 0
        %1303 = vmatprep.subr.bf16.mxu0 0
        %1304 = vmatpush1.bf16.msra.mxu0 0
        %1305 = vmatprep.mubr.bf16.mxu0 0
        %1306 = vmatmul.mubr.bf16.gmra.mrb[0].mxu0 %v1268
        %v1307 = vpop.f32.mrb[0].mxu0
        %v1308 = vadd.f32 0.0, %v1307
        %v1309 = vpop.f32.mrb[0].mxu0
        %v1310 = vpop.f32.mrb[0].mxu0
        %v1311 = vpop.f32.mrb[0].mxu0
        %1312 = vdwg.mxu0
        %1314 = vrot.lane.b32.xlu0 %v1308, 16
        %v1315 = vpop.permute.xlu0 %1314
        %1317 = vst.msk [vmem:[#allocation4 + $0x8] sm:$0xff] %vm1078, %v1315
        %v1318 = vld [vmem:[#allocation4] sm:$0xff]
        %v1319 = vld [vmem:[#allocation4 + $0x8] sm:$0xff]
        %v1320 = vpack.c.bf16 %v1319, %v1318
        %v1321 = vld [vmem:[%s676] sm:$0xf]
        %v1322 = vld [vmem:[%s676 + $0x4] sm:$0xf]
        %v1323 = vld [vmem:[%s676 + $0x8] sm:$0xf]
        %v1324 = vld [vmem:[%s676 + $0xc] sm:$0xf]
        %v1325 = vld [vmem:[%s679] sm:$0x1]
        %v1327 = vlaneseq
        %v1328 = vshrl.u32 %v1327, 7
        %v1329 = vsub.s32 0, %v1328
        %v1330 = vrot.slane %v1325, %v1329
        %v1336 = vunpack.c.l.b16 %v1321
        %v1337 = vunpack.c.l.b16 %v1322
        %v1338 = vunpack.c.l.b16 %v1323
        %v1339 = vunpack.c.l.b16 %v1324
        %v1340 = vpack.c.b16 %v1337, %v1336
        %v1341 = vpack.c.b16 %v1339, %v1338
        %v1345 = vsel %vm789, %v1320, 0
        %1347 = vmatprep.subr.bf16.mxu0 0
        %1348 = vmatpush1.bf16.msra.mxu0 %v1340
        %1349 = vmatprep.subr.bf16.mxu0 0
        %1350 = vmatpush1.bf16.msra.mxu0 %v1341
        %1351 = vmatprep.subr.bf16.mxu0 0
        %1352 = vmatpush1.bf16.msra.mxu0 0
        %1353 = vmatprep.subr.bf16.mxu0 0
        %1354 = vmatpush1.bf16.msra.mxu0 0
        %1355 = vmatprep.subr.bf16.mxu0 0
        %1356 = vmatpush1.bf16.msra.mxu0 0
        %1357 = vmatprep.subr.bf16.mxu0 0
        %1358 = vmatpush1.bf16.msra.mxu0 0
        %1359 = vmatprep.subr.bf16.mxu0 0
        %1360 = vmatpush1.bf16.msra.mxu0 0
        %1361 = vmatprep.subr.bf16.mxu0 0
        %1362 = vmatpush1.bf16.msra.mxu0 0
        %1363 = vmatprep.subr.bf16.mxu0 0
        %1364 = vmatpush1.bf16.msra.mxu0 0
        %1365 = vmatprep.subr.bf16.mxu0 0
        %1366 = vmatpush1.bf16.msra.mxu0 0
        %1367 = vmatprep.subr.bf16.mxu0 0
        %1368 = vmatpush1.bf16.msra.mxu0 0
        %1369 = vmatprep.subr.bf16.mxu0 0
        %1370 = vmatpush1.bf16.msra.mxu0 0
        %1371 = vmatprep.subr.bf16.mxu0 0
        %1372 = vmatpush1.bf16.msra.mxu0 0
        %1373 = vmatprep.subr.bf16.mxu0 0
        %1374 = vmatpush1.bf16.msra.mxu0 0
        %1375 = vmatprep.subr.bf16.mxu0 0
        %1376 = vmatpush1.bf16.msra.mxu0 0
        %1377 = vmatprep.subr.bf16.mxu0 0
        %1378 = vmatpush1.bf16.msra.mxu0 0
        %1379 = vmatprep.mubr.bf16.mxu0 0
        %1380 = vmatmul.mubr.bf16.gmra.mrb[0].mxu0 %v1345
        %v1381 = vpop.f32.mrb[0].mxu0
        %v1382 = vadd.f32 %v1330, %v1381
        %v1383 = vpop.f32.mrb[0].mxu0
        %v1384 = vpop.f32.mrb[0].mxu0
        %v1385 = vadd.f32 %v1330, %v1384
        %v1386 = vpop.f32.mrb[0].mxu0
        %1387 = vdwg.mxu0
        %v1388 = vadd.f32 %v763, %v1382
        %v1389 = vadd.f32 %v764, %v1385
        %v1390 = vld [vmem:[%s682] sm:$0x1]
        %v1391 = vld [vmem:[%s685] sm:$0x1]
        %v1392 = vsel %vm789, %v1388, 0.0
        %1393 = vadd.xlane.f32.xlu0 %v1392
        %v1394 = vpop.xlane.xlu0 %1393
        %v1395 = vsel %vm789, %v1389, 0.0
        %1396 = vadd.xlane.f32.xlu0 %v1395
        %v1397 = vpop.xlane.xlu0 %1396
        %v1398 = vrcp.pop 32.0
        %v1399 = vmul.f32 %v1394, %v1398
        %v1400 = vmul.f32 %v1397, %v1398
        %v1401 = vsub.f32 %v1388, %v1399
        %v1402 = vsub.f32 %v1389, %v1400
        %v1403 = vmul.f32 %v1401, %v1401
        %v1404 = vmul.f32 %v1402, %v1402
        %v1405 = vsel %vm789, %v1403, 0.0
        %1406 = vadd.xlane.f32.xlu0 %v1405
        %v1407 = vpop.xlane.xlu0 %1406
        %v1408 = vsel %vm789, %v1404, 0.0
        %1409 = vadd.xlane.f32.xlu0 %v1408
        %v1410 = vpop.xlane.xlu0 %1409
        %v1411 = vmul.f32 %v1407, %v1398
        %v1412 = vmul.f32 %v1410, %v1398
        %v1413 = vadd.f32 %v1411, 1e-12
        %v1414 = vadd.f32 %v1412, 1e-12
        %v1415 = vrsqrt.pop %v1413
        %v1416 = vrsqrt.pop %v1414
        %v1417 = vmul.f32 %v1401, %v1415
        %v1418 = vmul.f32 %v1402, %v1416
        %v1420 = vlaneseq
        %v1421 = vshrl.u32 %v1420, 7
        %v1422 = vsub.s32 0, %v1421
        %v1423 = vrot.slane %v1390, %v1422
        %v1425 = vmul.f32 %v1417, %v1423
        %v1426 = vmul.f32 %v1418, %v1423
        %v1428 = vlaneseq
        %v1429 = vshrl.u32 %v1428, 7
        %v1430 = vsub.s32 0, %v1429
        %v1431 = vrot.slane %v1391, %v1430
        %v1433 = vadd.f32 %v1425, %v1431
        %v1434 = vadd.f32 %v1426, %v1431
        %v1435 = vpack.c.bf16 %v1434, %v1433
        %v1436 = vld [vmem:[%s690] sm:$0xf]
        %v1437 = vld [vmem:[%s690 + $0x4] sm:$0xf]
        %v1438 = vld [vmem:[%s690 + $0x8] sm:$0xf]
        %v1439 = vld [vmem:[%s690 + $0xc] sm:$0xf]
        %v1440 = vld [vmem:[%s693] sm:$0x1]
        %v1442 = vlaneseq
        %v1443 = vshrl.u32 %v1442, 7
        %v1444 = vsub.s32 0, %v1443
        %v1445 = vrot.slane %v1440, %v1444
        %v1451 = vunpack.c.l.b16 %v1436
        %v1452 = vunpack.c.l.b16 %v1437
        %v1453 = vunpack.c.l.b16 %v1438
        %v1454 = vunpack.c.l.b16 %v1439
        %v1455 = vpack.c.b16 %v1452, %v1451
        %v1456 = vpack.c.b16 %v1454, %v1453
        %v1460 = vsel %vm789, %v1435, 0
        %1462 = vmatprep.subr.bf16.mxu0 0
        %1463 = vmatpush1.bf16.msra.mxu0 %v1455
        %1464 = vmatprep.subr.bf16.mxu0 0
        %1465 = vmatpush1.bf16.msra.mxu0 %v1456
        %1466 = vmatprep.subr.bf16.mxu0 0
        %1467 = vmatpush1.bf16.msra.mxu0 0
        %1468 = vmatprep.subr.bf16.mxu0 0
        %1469 = vmatpush1.bf16.msra.mxu0 0
        %1470 = vmatprep.subr.bf16.mxu0 0
        %1471 = vmatpush1.bf16.msra.mxu0 0
        %1472 = vmatprep.subr.bf16.mxu0 0
        %1473 = vmatpush1.bf16.msra.mxu0 0
        %1474 = vmatprep.subr.bf16.mxu0 0
        %1475 = vmatpush1.bf16.msra.mxu0 0
        %1476 = vmatprep.subr.bf16.mxu0 0
        %1477 = vmatpush1.bf16.msra.mxu0 0
        %1478 = vmatprep.subr.bf16.mxu0 0
        %1479 = vmatpush1.bf16.msra.mxu0 0
        %1480 = vmatprep.subr.bf16.mxu0 0
        %1481 = vmatpush1.bf16.msra.mxu0 0
        %1482 = vmatprep.subr.bf16.mxu0 0
        %1483 = vmatpush1.bf16.msra.mxu0 0
        %1484 = vmatprep.subr.bf16.mxu0 0
        %1485 = vmatpush1.bf16.msra.mxu0 0
        %1486 = vmatprep.subr.bf16.mxu0 0
        %1487 = vmatpush1.bf16.msra.mxu0 0
        %1488 = vmatprep.subr.bf16.mxu0 0
        %1489 = vmatpush1.bf16.msra.mxu0 0
        %1490 = vmatprep.subr.bf16.mxu0 0
        %1491 = vmatpush1.bf16.msra.mxu0 0
        %1492 = vmatprep.subr.bf16.mxu0 0
        %1493 = vmatpush1.bf16.msra.mxu0 0
        %1494 = vmatprep.mubr.bf16.mxu0 0
        %1495 = vmatmul.mubr.bf16.gmra.mrb[0].mxu0 %v1460
        %v1496 = vpop.f32.mrb[0].mxu0
        %v1497 = vadd.f32 %v1445, %v1496
        %v1498 = vpop.f32.mrb[0].mxu0
        %v1499 = vpop.f32.mrb[0].mxu0
        %v1500 = vadd.f32 %v1445, %v1499
        %v1501 = vpop.f32.mrb[0].mxu0
        %1502 = vdwg.mxu0
        %v1503 = vmul.f32 %v1497, %v1497
        %v1504 = vmul.f32 %v1500, %v1500
        %v1505 = vmul.f32 %v1497, %v1503
        %v1506 = vmul.f32 %v1500, %v1504
        %v1507 = vmul.f32 %v1505, 0.044715
        %v1508 = vmul.f32 %v1506, 0.044715
        %v1509 = vadd.f32 %v1497, %v1507
        %v1510 = vadd.f32 %v1500, %v1508
        %v1511 = vmul.f32 %v1509, 0.7978846
        %v1512 = vmul.f32 %v1510, 0.7978846
        %v1513 = vtanh.pop %v1511
        %v1514 = vtanh.pop %v1512
        %v1515 = vadd.f32 %v1513, 1.0
        %v1516 = vadd.f32 %v1514, 1.0
        %v1517 = vmul.f32 %v1515, 0.5
        %v1518 = vmul.f32 %v1516, 0.5
        %v1519 = vmul.f32 %v1497, %v1517
        %v1520 = vmul.f32 %v1500, %v1518
        %v1521 = vpack.c.bf16 %v1520, %v1519
        %v1522 = vld [vmem:[%s698] sm:$0xf]
        %v1523 = vld [vmem:[%s698 + $0x4] sm:$0xf]
        %v1524 = vld [vmem:[%s698 + $0x8] sm:$0xf]
        %v1525 = vld [vmem:[%s698 + $0xc] sm:$0xf]
        %v1526 = vld [vmem:[%s698 + $0x10] sm:$0xf]
        %v1527 = vld [vmem:[%s698 + $0x14] sm:$0xf]
        %v1528 = vld [vmem:[%s698 + $0x18] sm:$0xf]
        %v1529 = vld [vmem:[%s698 + $0x1c] sm:$0xf]
        %v1530 = vld [vmem:[%s701] sm:$0x1]
        %v1532 = vlaneseq
        %v1533 = vshrl.u32 %v1532, 7
        %v1534 = vsub.s32 0, %v1533
        %v1535 = vrot.slane %v1530, %v1534
        %v1545 = vunpack.c.l.b16 %v1522
        %v1546 = vunpack.c.l.b16 %v1523
        %v1547 = vunpack.c.l.b16 %v1524
        %v1548 = vunpack.c.l.b16 %v1525
        %v1549 = vunpack.c.l.b16 %v1526
        %v1550 = vunpack.c.l.b16 %v1527
        %v1551 = vunpack.c.l.b16 %v1528
        %v1552 = vunpack.c.l.b16 %v1529
        %v1553 = vpack.c.b16 %v1546, %v1545
        %v1554 = vpack.c.b16 %v1548, %v1547
        %v1555 = vpack.c.b16 %v1550, %v1549
        %v1556 = vpack.c.b16 %v1552, %v1551
        %vm1561 = vcmask 523264
        %v1563 = vsel %vm1561, %v1521, 0
        %1565 = vmatprep.subr.bf16.mxu0 0
        %1566 = vmatpush1.bf16.msra.mxu0 %v1553
        %1567 = vmatprep.subr.bf16.mxu0 0
        %1568 = vmatpush1.bf16.msra.mxu0 %v1554
        %1569 = vmatprep.subr.bf16.mxu0 0
        %1570 = vmatpush1.bf16.msra.mxu0 %v1555
        %1571 = vmatprep.subr.bf16.mxu0 0
        %1572 = vmatpush1.bf16.msra.mxu0 %v1556
        %1573 = vmatprep.subr.bf16.mxu0 0
        %1574 = vmatpush1.bf16.msra.mxu0 0
        %1575 = vmatprep.subr.bf16.mxu0 0
        %1576 = vmatpush1.bf16.msra.mxu0 0
        %1577 = vmatprep.subr.bf16.mxu0 0
        %1578 = vmatpush1.bf16.msra.mxu0 0
        %1579 = vmatprep.subr.bf16.mxu0 0
        %1580 = vmatpush1.bf16.msra.mxu0 0
        %1581 = vmatprep.subr.bf16.mxu0 0
        %1582 = vmatpush1.bf16.msra.mxu0 0
        %1583 = vmatprep.subr.bf16.mxu0 0
        %1584 = vmatpush1.bf16.msra.mxu0 0
        %1585 = vmatprep.subr.bf16.mxu0 0
        %1586 = vmatpush1.bf16.msra.mxu0 0
        %1587 = vmatprep.subr.bf16.mxu0 0
        %1588 = vmatpush1.bf16.msra.mxu0 0
        %1589 = vmatprep.subr.bf16.mxu0 0
        %1590 = vmatpush1.bf16.msra.mxu0 0
        %1591 = vmatprep.subr.bf16.mxu0 0
        %1592 = vmatpush1.bf16.msra.mxu0 0
        %1593 = vmatprep.subr.bf16.mxu0 0
        %1594 = vmatpush1.bf16.msra.mxu0 0
        %1595 = vmatprep.subr.bf16.mxu0 0
        %1596 = vmatpush1.bf16.msra.mxu0 0
        %1597 = vmatprep.mubr.bf16.mxu0 0
        %1598 = vmatmul.mubr.bf16.gmra.mrb[0].mxu0 %v1563
        %v1599 = vpop.f32.mrb[0].mxu0
        %v1600 = vadd.f32 %v1535, %v1599
        %v1601 = vpop.f32.mrb[0].mxu0
        %v1602 = vpop.f32.mrb[0].mxu0
        %v1603 = vadd.f32 %v1535, %v1602
        %v1604 = vpop.f32.mrb[0].mxu0
        %1605 = vdwg.mxu0
        %v1606 = vadd.f32 %v1433, %v1600
        %v1607 = vadd.f32 %v1434, %v1603
        %v1608 = vld [vmem:[%s704] sm:$0x1]
        %v1609 = vld [vmem:[%s707] sm:$0x1]
        %v1610 = vsel %vm789, %v1606, 0.0
        %1611 = vadd.xlane.f32.xlu0 %v1610
        %v1612 = vpop.xlane.xlu0 %1611
        %v1613 = vsel %vm789, %v1607, 0.0
        %1614 = vadd.xlane.f32.xlu0 %v1613
        %v1615 = vpop.xlane.xlu0 %1614
        %v1616 = vmul.f32 %v1612, %v1398
        %v1617 = vmul.f32 %v1615, %v1398
        %v1618 = vsub.f32 %v1606, %v1616
        %v1619 = vsub.f32 %v1607, %v1617
        %v1620 = vmul.f32 %v1618, %v1618
        %v1621 = vmul.f32 %v1619, %v1619
        %v1622 = vsel %vm789, %v1620, 0.0
        %1623 = vadd.xlane.f32.xlu0 %v1622
        %v1624 = vpop.xlane.xlu0 %1623
        %v1625 = vsel %vm789, %v1621, 0.0
        %1626 = vadd.xlane.f32.xlu0 %v1625
        %v1627 = vpop.xlane.xlu0 %1626
        %v1628 = vmul.f32 %v1624, %v1398
        %v1629 = vmul.f32 %v1627, %v1398
        %v1630 = vadd.f32 %v1628, 1e-12
        %v1631 = vadd.f32 %v1629, 1e-12
        %v1632 = vrsqrt.pop %v1630
        %v1633 = vrsqrt.pop %v1631
        %v1634 = vmul.f32 %v1618, %v1632
        %v1635 = vmul.f32 %v1619, %v1633
        %v1637 = vlaneseq
        %v1638 = vshrl.u32 %v1637, 7
        %v1639 = vsub.s32 0, %v1638
        %v1640 = vrot.slane %v1608, %v1639
        %v1642 = vmul.f32 %v1634, %v1640
        %v1643 = vmul.f32 %v1635, %v1640
        %v1645 = vlaneseq
        %v1646 = vshrl.u32 %v1645, 7
        %v1647 = vsub.s32 0, %v1646
        %v1648 = vrot.slane %v1609, %v1647
        %v1650 = vadd.f32 %v1642, %v1648
        %v1651 = vadd.f32 %v1643, %v1648
        %1652 = vst.msk [vmem:[#allocation2] sm:$0xff] %vm789, %v1650
        %1653 = vst.msk [vmem:[#allocation2 + $0x8] sm:$0xff] %vm789, %v1651
        %p1654 = scmp.eq.s32.totalorder %s30, 1
        // Predicated region
        $region97: #{tpu_custom_call.1} parent=83 // pred_check
          %p1655 = pneg %p1654
        $region98: #{tpu_custom_call.1} parent=83 // pred_check_branch
          %1657 = sbr.rel (%p1655) target = $region100
        $region99: #{tpu_custom_call.1} parent=83 // pred_region
          %1658 = vst.msk [vmem:[#allocation10] sm:$0xff] %vm789, %v1650
          %1659 = vst.msk [vmem:[#allocation10 + $0x8] sm:$0xff] %vm789, %v1651
        $region100: #{tpu_custom_call.1} parent=83 // pred_fallthru
          _
        // Predicated region
        $region101: #{tpu_custom_call.1} parent=83 // pred_check
          %p1660 = pneg %p439
        $region102: #{tpu_custom_call.1} parent=83 // pred_check_branch
          %1662 = sbr.rel (%p1660) target = $region104
        $region103: #{tpu_custom_call.1} parent=83 // pred_region
          %s1664 = ssub.s32 256, 256
          %1665 = vsyncadd [#allocation7], %s1664
          %s1666 = sshll.u32 [#allocation10], 4
          %s1667 = int_to_ptr.vmem [resolvable:$true] %s1666
          %1672 = dma.vmem_to_hbm [thread:$0]  %s1667, 256, %s16, [#allocation7], 128, 128, 8
        $region104: #{tpu_custom_call.1} parent=83 // pred_fallthru
          _
        // Predicated region
        $region105: #{tpu_custom_call.1} parent=83 // pred_check
          %p1673 = pneg %p439
        $region106: #{tpu_custom_call.1} parent=83 // pred_check_branch
          %1675 = sbr.rel (%p1673) target = $region108
        $region107: #{tpu_custom_call.1} parent=83 // pred_region
          %1676 = dma.done [#allocation7], 256
        $region108: #{tpu_custom_call.1} parent=83 // pred_fallthru
          _
      $region84: #{tpu_custom_call.1} parent=5 // pred_fallthru
        _
      %p1677 = scmp.le.s32.totalorder 2, %s25
      // Predicated region
      $region109: #{tpu_custom_call.1} parent=5 // pred_check
        %p1678 = pneg %p1677
      $region110: #{tpu_custom_call.1} parent=5 // pred_check_branch
        %1680 = sbr.rel (%p1678) target = $region112
      $region111: #{tpu_custom_call.1} parent=5 // pred_region
        %s1681 = ssub.s32 %s25, 2
      $region112: #{tpu_custom_call.1} parent=5 // pred_fallthru
        _
    $region6: #{tpu_custom_call.1} parent=1 // loop_footer
      %s29 = sadd.s32 1, %s25
    $region7: #{tpu_custom_call.1} parent=1 // loop_footer_branch
      %24 = sbr.rel target = $region3
    $region8: #{tpu_custom_call.1} parent=1 // loop_exit
      _
    %1682 = vsyncpa [#allocation6], 1
    %s1683 = scalar_lea.sflag [#allocation6], 1
    %1684 = vsyncpa %s1683, 1
    %1685 = vsyncpa [#allocation9], 1
    %1686 = vsyncpa [#allocation7], 1
    %s1687 = scalar_lea.sflag [#allocation7], 1
    %1688 = vsyncpa %s1687, 1

</llo_original>
